<compile_context>
chip_gen: v5e
topology: v5e:2x2
jax: 0.10.0
libtpu: 0.0.40
codegen_flags: <defaults>
</compile_context>

<pallas_src>
import jax
import jax.numpy as jnp
from jax import lax
from jax.experimental import pallas as pl
from jax.experimental.pallas import tpu as pltpu


def rnn_kernel(x_ref, wih0_ref, wih_ref, whh_ref, b_ref, wlin_ref, blin_ref,
               out_ref, seq_buf):
    S, B, H = seq_buf.shape
    in_size = x_ref.shape[-1]
    num_layers = whh_ref.shape[0]
    out_size = out_ref.shape[-1]

    # Static Python loop over layers (weights are small and fully VMEM-resident).
    for l in range(num_layers):
        # Hoisted input projection: one MXU matmul over ALL timesteps, with the
        # folded bias (b_ih + b_hh) added once.
        if l == 0:
            inp2d = x_ref[...].reshape(S * B, in_size)
            w_in = wih0_ref[...]                    # (in_size, H), pre-transposed
        else:
            inp2d = seq_buf[...].reshape(S * B, H)
            w_in = wih_ref[l - 1]                   # (H, H), pre-transposed
        pre = jnp.dot(inp2d, w_in, preferred_element_type=jnp.float32) + b_ref[l]
        seq_buf[...] = pre.reshape(S, B, H)

        whh_t = whh_ref[l]                          # (H, H), pre-transposed

        # Recurrence: only the serial part stays in the loop.
        #   h_t = tanh(pre_t + h_{t-1} @ W_hh^T)
        def step(t, h):
            h_new = jnp.tanh(
                seq_buf[t]
                + jnp.dot(h, whh_t, preferred_element_type=jnp.float32))
            seq_buf[t] = h_new                      # becomes next layer's input
            return h_new

        lax.fori_loop(0, S, step, jnp.zeros((B, H), jnp.float32), unroll=True)

    # Linear head over the whole output sequence: one 2-D matmul.
    y = jnp.dot(seq_buf[...].reshape(S * B, H), wlin_ref[...],
                preferred_element_type=jnp.float32) + blin_ref[...]
    out_ref[...] = y.reshape(S, B, out_size)
    # TODO(synk): for large batch on v7x, add a leading 'parallel' grid axis over
    # batch to use the second TensorCore (layers/time are inherently serial).


def rnn_forward(x, w_ih_list, w_hh_list, b_ih_list, b_hh_list, w_lin, b_lin):
    """x: (seq, batch, input_size). Torch weight layouts:
       w_ih[0]: (H, in), w_ih[l>0]: (H, H), w_hh[l]: (H, H),
       b_ih/b_hh: (H,), w_lin: (out, H), b_lin: (out,)."""
    seq, batch, in_size = x.shape
    hidden = w_hh_list[0].shape[0]
    num_layers = len(w_ih_list)
    out_size = w_lin.shape[0]
    f32 = jnp.float32

    # Pre-transpose all weights in the wrapper so in-kernel dots need no .T.
    wih0_t = w_ih_list[0].astype(f32).T                              # (in, H)
    if num_layers > 1:
        wih_rest_t = jnp.stack([w.astype(f32).T for w in w_ih_list[1:]])  # (L-1,H,H)
    else:
        wih_rest_t = jnp.zeros((1, hidden, hidden), f32)             # unused dummy
    whh_t = jnp.stack([w.astype(f32).T for w in w_hh_list])          # (L, H, H)
    # Fold the two biases into one.
    b_all = jnp.stack([(b_ih_list[l] + b_hh_list[l]).astype(f32)
                       for l in range(num_layers)])[:, None, :]      # (L, 1, H)
    wlin_t = w_lin.astype(f32).T                                     # (H, out)
    blin_2d = b_lin.astype(f32)[None, :]                             # (1, out)

    vmem = pl.BlockSpec(memory_space=pltpu.MemorySpace.VMEM)
    return pl.pallas_call(
        rnn_kernel,
        out_shape=jax.ShapeDtypeStruct((seq, batch, out_size), jnp.float32),
        in_specs=[vmem] * 7,
        out_specs=vmem,
        scratch_shapes=[pltpu.VMEM((seq, batch, hidden), jnp.float32)],
    )(x.astype(f32), wih0_t, wih_rest_t, whh_t, b_all, wlin_t, blin_2d)


def rnn_reference(x, w_ih_list, w_hh_list, b_ih_list, b_hh_list, w_lin, b_lin):
    seq, batch, _ = x.shape
    hidden = w_hh_list[0].shape[0]
    layer_in = x
    for l in range(len(w_ih_list)):
        h = jnp.zeros((batch, hidden), jnp.float32)
        outs = []
        for t in range(seq):
            h = jnp.tanh(layer_in[t] @ w_ih_list[l].T + b_ih_list[l]
                         + h @ w_hh_list[l].T + b_hh_list[l])
            outs.append(h)
        layer_in = jnp.stack(outs)
    s, b, hdim = layer_in.shape
    y = layer_in.reshape(s * b, hdim) @ w_lin.T + b_lin
    return y.reshape(s, b, -1)


if __name__ == "__main__":
    input_size, hidden_size, output_size, num_layers = 4, 32, 1, 5
    seq, batch = 8, 2

    key = jax.random.PRNGKey(0)
    k = 1.0 / jnp.sqrt(hidden_size)  # torch default uniform(-1/sqrt(H), 1/sqrt(H))

    keys = jax.random.split(key, 4 * num_layers + 3)
    w_ih_list, w_hh_list, b_ih_list, b_hh_list = [], [], [], []
    idx = 0
    for l in range(num_layers):
        in_dim = input_size if l == 0 else hidden_size
        w_ih_list.append(jax.random.uniform(keys[idx], (hidden_size, in_dim),
                                            jnp.float32, -k, k)); idx += 1
        w_hh_list.append(jax.random.uniform(keys[idx], (hidden_size, hidden_size),
                                            jnp.float32, -k, k)); idx += 1
        b_ih_list.append(jax.random.uniform(keys[idx], (hidden_size,),
                                            jnp.float32, -k, k)); idx += 1
        b_hh_list.append(jax.random.uniform(keys[idx], (hidden_size,),
                                            jnp.float32, -k, k)); idx += 1
    w_lin = jax.random.uniform(keys[idx], (output_size, hidden_size),
                               jnp.float32, -k, k); idx += 1
    b_lin = jax.random.uniform(keys[idx], (output_size,),
                               jnp.float32, -k, k); idx += 1
    x = jax.random.normal(keys[idx], (seq, batch, input_size), jnp.float32)

    out = rnn_forward(x, w_ih_list, w_hh_list, b_ih_list, b_hh_list, w_lin, b_lin)
    out = jax.block_until_ready(out)

    ref = rnn_reference(x, w_ih_list, w_hh_list, b_ih_list, b_hh_list, w_lin, b_lin)
    assert out.shape == (seq, batch, output_size)
    assert jnp.allclose(out, ref, atol=1e-5, rtol=1e-5), "mismatch vs JAX reference"

    print("KERNEL_OK")
</pallas_src>

<mosaic_0001>
module attributes {stable_mosaic.version = 11 : i64} {
  func.func @rnn_kernel(%arg0: memref<8x2x4xf32, #tpu.memory_space<vmem>>, %arg1: memref<4x32xf32, #tpu.memory_space<vmem>>, %arg2: memref<4x32x32xf32, #tpu.memory_space<vmem>>, %arg3: memref<5x32x32xf32, #tpu.memory_space<vmem>>, %arg4: memref<5x1x32xf32, #tpu.memory_space<vmem>>, %arg5: memref<32x1xf32, #tpu.memory_space<vmem>>, %arg6: memref<1x1xf32, #tpu.memory_space<vmem>>, %arg7: memref<8x2x1xf32, #tpu.memory_space<vmem>>, %arg8: memref<8x2x32xf32, #tpu.memory_space<vmem>>) attributes {dimension_semantics = [], scalar_prefetch = 0 : i64, scratch_operands = 1 : i64, tpu.core_type = #tpu.core_type<tc>} {
    %c0 = arith.constant 0 : index
    %c0_0 = arith.constant 0 : index
    %c0_1 = arith.constant 0 : index
    %0 = vector.load %arg0[%c0, %c0_0, %c0_1] : memref<8x2x4xf32, #tpu.memory_space<vmem>>, vector<8x2x4xf32>
    %1 = vector.shape_cast %0 : vector<8x2x4xf32> to vector<16x4xf32>
    %c0_2 = arith.constant 0 : index
    %c0_3 = arith.constant 0 : index
    %2 = vector.load %arg1[%c0_2, %c0_3] : memref<4x32xf32, #tpu.memory_space<vmem>>, vector<4x32xf32>
    %cst = arith.constant dense<0.000000e+00> : vector<16x32xf32>
    %3 = tpu.matmul %1, %2, %cst {dimension_numbers = #tpu.dot_dimension_numbers<[1], [0], [0], [1], [0, 0, 1, 1], [], []>} : vector<16x4xf32>, vector<4x32xf32>, vector<16x32xf32> -> vector<16x32xf32>
    %c0_4 = arith.constant 0 : index
    %c0_5 = arith.constant 0 : index
    %c0_6 = arith.constant 0 : index
    %4 = vector.load %arg4[%c0_4, %c0_5, %c0_6] : memref<5x1x32xf32, #tpu.memory_space<vmem>>, vector<1x1x32xf32>
    %5 = vector.shape_cast %4 : vector<1x1x32xf32> to vector<1x32xf32>
    %6 = vector.broadcast %5 : vector<1x32xf32> to vector<16x32xf32>
    %7 = arith.addf %3, %6 : vector<16x32xf32>
    %8 = vector.shape_cast %7 : vector<16x32xf32> to vector<8x2x32xf32>
    %c0_7 = arith.constant 0 : index
    %c0_8 = arith.constant 0 : index
    %c0_9 = arith.constant 0 : index
    %9 = vector.load %arg8[%c0_7, %c0_8, %c0_9] : memref<8x2x32xf32, #tpu.memory_space<vmem>>, vector<8x2x32xf32>
    tpu.vector_store %arg8[%c0_7, %c0_8, %c0_9], %8 {strides = array<i32>} : memref<8x2x32xf32, #tpu.memory_space<vmem>>, vector<8x2x32xf32>,
    %c0_10 = arith.constant 0 : index
    %c0_11 = arith.constant 0 : index
    %c0_12 = arith.constant 0 : index
    %10 = vector.load %arg3[%c0_10, %c0_11, %c0_12] : memref<5x32x32xf32, #tpu.memory_space<vmem>>, vector<1x32x32xf32>
    %11 = vector.shape_cast %10 : vector<1x32x32xf32> to vector<32x32xf32>
    %cst_13 = arith.constant 0.000000e+00 : f32
    %12 = vector.broadcast %cst_13 : f32 to vector<2x32xf32>
    %c0_i32 = arith.constant 0 : i32
    %13 = arith.index_cast %c0_i32 : i32 to index
    %c0_14 = arith.constant 0 : index
    %c0_15 = arith.constant 0 : index
    %14 = vector.load %arg8[%13, %c0_14, %c0_15] : memref<8x2x32xf32, #tpu.memory_space<vmem>>, vector<1x2x32xf32>
    %15 = vector.shape_cast %14 : vector<1x2x32xf32> to vector<2x32xf32>
    %cst_16 = arith.constant dense<0.000000e+00> : vector<2x32xf32>
    %16 = tpu.matmul %12, %11, %cst_16 {dimension_numbers = #tpu.dot_dimension_numbers<[1], [0], [0], [1], [0, 0, 1, 1], [], []>} : vector<2x32xf32>, vector<32x32xf32>, vector<2x32xf32> -> vector<2x32xf32>
    %17 = arith.addf %15, %16 : vector<2x32xf32>
    %18 = math.tanh %17 : vector<2x32xf32>
    %19 = arith.index_cast %c0_i32 : i32 to index
    %c0_17 = arith.constant 0 : index
    %c0_18 = arith.constant 0 : index
    %20 = vector.load %arg8[%19, %c0_17, %c0_18] : memref<8x2x32xf32, #tpu.memory_space<vmem>>, vector<1x2x32xf32>
    %21 = vector.shape_cast %20 : vector<1x2x32xf32> to vector<2x32xf32>
    %22 = vector.shape_cast %18 : vector<2x32xf32> to vector<1x2x32xf32>
    tpu.vector_store %arg8[%19, %c0_17, %c0_18], %22 {strides = array<i32>} : memref<8x2x32xf32, #tpu.memory_space<vmem>>, vector<1x2x32xf32>,
    %c1_i32 = arith.constant 1 : i32
    %23 = arith.index_cast %c1_i32 : i32 to index
    %c0_19 = arith.constant 0 : index
    %c0_20 = arith.constant 0 : index
    %24 = vector.load %arg8[%23, %c0_19, %c0_20] : memref<8x2x32xf32, #tpu.memory_space<vmem>>, vector<1x2x32xf32>
    %25 = vector.shape_cast %24 : vector<1x2x32xf32> to vector<2x32xf32>
    %cst_21 = arith.constant dense<0.000000e+00> : vector<2x32xf32>
    %26 = tpu.matmul %18, %11, %cst_21 {dimension_numbers = #tpu.dot_dimension_numbers<[1], [0], [0], [1], [0, 0, 1, 1], [], []>} : vector<2x32xf32>, vector<32x32xf32>, vector<2x32xf32> -> vector<2x32xf32>
    %27 = arith.addf %25, %26 : vector<2x32xf32>
    %28 = math.tanh %27 : vector<2x32xf32>
    %29 = arith.index_cast %c1_i32 : i32 to index
    %c0_22 = arith.constant 0 : index
    %c0_23 = arith.constant 0 : index
    %30 = vector.load %arg8[%29, %c0_22, %c0_23] : memref<8x2x32xf32, #tpu.memory_space<vmem>>, vector<1x2x32xf32>
    %31 = vector.shape_cast %30 : vector<1x2x32xf32> to vector<2x32xf32>
    %32 = vector.shape_cast %28 : vector<2x32xf32> to vector<1x2x32xf32>
    tpu.vector_store %arg8[%29, %c0_22, %c0_23], %32 {strides = array<i32>} : memref<8x2x32xf32, #tpu.memory_space<vmem>>, vector<1x2x32xf32>,
    %c2_i32 = arith.constant 2 : i32
    %33 = arith.index_cast %c2_i32 : i32 to index
    %c0_24 = arith.constant 0 : index
    %c0_25 = arith.constant 0 : index
    %34 = vector.load %arg8[%33, %c0_24, %c0_25] : memref<8x2x32xf32, #tpu.memory_space<vmem>>, vector<1x2x32xf32>
    %35 = vector.shape_cast %34 : vector<1x2x32xf32> to vector<2x32xf32>
    %cst_26 = arith.constant dense<0.000000e+00> : vector<2x32xf32>
    %36 = tpu.matmul %28, %11, %cst_26 {dimension_numbers = #tpu.dot_dimension_numbers<[1], [0], [0], [1], [0, 0, 1, 1], [], []>} : vector<2x32xf32>, vector<32x32xf32>, vector<2x32xf32> -> vector<2x32xf32>
    %37 = arith.addf %35, %36 : vector<2x32xf32>
    %38 = math.tanh %37 : vector<2x32xf32>
    %39 = arith.index_cast %c2_i32 : i32 to index
    %c0_27 = arith.constant 0 : index
    %c0_28 = arith.constant 0 : index
    %40 = vector.load %arg8[%39, %c0_27, %c0_28] : memref<8x2x32xf32, #tpu.memory_space<vmem>>, vector<1x2x32xf32>
    %41 = vector.shape_cast %40 : vector<1x2x32xf32> to vector<2x32xf32>
    %42 = vector.shape_cast %38 : vector<2x32xf32> to vector<1x2x32xf32>
    tpu.vector_store %arg8[%39, %c0_27, %c0_28], %42 {strides = array<i32>} : memref<8x2x32xf32, #tpu.memory_space<vmem>>, vector<1x2x32xf32>,
    %c3_i32 = arith.constant 3 : i32
    %43 = arith.index_cast %c3_i32 : i32 to index
    %c0_29 = arith.constant 0 : index
    %c0_30 = arith.constant 0 : index
    %44 = vector.load %arg8[%43, %c0_29, %c0_30] : memref<8x2x32xf32, #tpu.memory_space<vmem>>, vector<1x2x32xf32>
    %45 = vector.shape_cast %44 : vector<1x2x32xf32> to vector<2x32xf32>
    %cst_31 = arith.constant dense<0.000000e+00> : vector<2x32xf32>
    %46 = tpu.matmul %38, %11, %cst_31 {dimension_numbers = #tpu.dot_dimension_numbers<[1], [0], [0], [1], [0, 0, 1, 1], [], []>} : vector<2x32xf32>, vector<32x32xf32>, vector<2x32xf32> -> vector<2x32xf32>
    %47 = arith.addf %45, %46 : vector<2x32xf32>
    %48 = math.tanh %47 : vector<2x32xf32>
    %49 = arith.index_cast %c3_i32 : i32 to index
    %c0_32 = arith.constant 0 : index
    %c0_33 = arith.constant 0 : index
    %50 = vector.load %arg8[%49, %c0_32, %c0_33] : memref<8x2x32xf32, #tpu.memory_space<vmem>>, vector<1x2x32xf32>
    %51 = vector.shape_cast %50 : vector<1x2x32xf32> to vector<2x32xf32>
    %52 = vector.shape_cast %48 : vector<2x32xf32> to vector<1x2x32xf32>
    tpu.vector_store %arg8[%49, %c0_32, %c0_33], %52 {strides = array<i32>} : memref<8x2x32xf32, #tpu.memory_space<vmem>>, vector<1x2x32xf32>,
    %c4_i32 = arith.constant 4 : i32
    %53 = arith.index_cast %c4_i32 : i32 to index
    %c0_34 = arith.constant 0 : index
    %c0_35 = arith.constant 0 : index
    %54 = vector.load %arg8[%53, %c0_34, %c0_35] : memref<8x2x32xf32, #tpu.memory_space<vmem>>, vector<1x2x32xf32>
    %55 = vector.shape_cast %54 : vector<1x2x32xf32> to vector<2x32xf32>
    %cst_36 = arith.constant dense<0.000000e+00> : vector<2x32xf32>
    %56 = tpu.matmul %48, %11, %cst_36 {dimension_numbers = #tpu.dot_dimension_numbers<[1], [0], [0], [1], [0, 0, 1, 1], [], []>} : vector<2x32xf32>, vector<32x32xf32>, vector<2x32xf32> -> vector<2x32xf32>
    %57 = arith.addf %55, %56 : vector<2x32xf32>
    %58 = math.tanh %57 : vector<2x32xf32>
    %59 = arith.index_cast %c4_i32 : i32 to index
    %c0_37 = arith.constant 0 : index
    %c0_38 = arith.constant 0 : index
    %60 = vector.load %arg8[%59, %c0_37, %c0_38] : memref<8x2x32xf32, #tpu.memory_space<vmem>>, vector<1x2x32xf32>
    %61 = vector.shape_cast %60 : vector<1x2x32xf32> to vector<2x32xf32>
    %62 = vector.shape_cast %58 : vector<2x32xf32> to vector<1x2x32xf32>
    tpu.vector_store %arg8[%59, %c0_37, %c0_38], %62 {strides = array<i32>} : memref<8x2x32xf32, #tpu.memory_space<vmem>>, vector<1x2x32xf32>,
    %c5_i32 = arith.constant 5 : i32
    %63 = arith.index_cast %c5_i32 : i32 to index
    %c0_39 = arith.constant 0 : index
    %c0_40 = arith.constant 0 : index
    %64 = vector.load %arg8[%63, %c0_39, %c0_40] : memref<8x2x32xf32, #tpu.memory_space<vmem>>, vector<1x2x32xf32>
    %65 = vector.shape_cast %64 : vector<1x2x32xf32> to vector<2x32xf32>
    %cst_41 = arith.constant dense<0.000000e+00> : vector<2x32xf32>
    %66 = tpu.matmul %58, %11, %cst_41 {dimension_numbers = #tpu.dot_dimension_numbers<[1], [0], [0], [1], [0, 0, 1, 1], [], []>} : vector<2x32xf32>, vector<32x32xf32>, vector<2x32xf32> -> vector<2x32xf32>
    %67 = arith.addf %65, %66 : vector<2x32xf32>
    %68 = math.tanh %67 : vector<2x32xf32>
    %69 = arith.index_cast %c5_i32 : i32 to index
    %c0_42 = arith.constant 0 : index
    %c0_43 = arith.constant 0 : index
    %70 = vector.load %arg8[%69, %c0_42, %c0_43] : memref<8x2x32xf32, #tpu.memory_space<vmem>>, vector<1x2x32xf32>
    %71 = vector.shape_cast %70 : vector<1x2x32xf32> to vector<2x32xf32>
    %72 = vector.shape_cast %68 : vector<2x32xf32> to vector<1x2x32xf32>
    tpu.vector_store %arg8[%69, %c0_42, %c0_43], %72 {strides = array<i32>} : memref<8x2x32xf32, #tpu.memory_space<vmem>>, vector<1x2x32xf32>,
    %c6_i32 = arith.constant 6 : i32
    %73 = arith.index_cast %c6_i32 : i32 to index
    %c0_44 = arith.constant 0 : index
    %c0_45 = arith.constant 0 : index
    %74 = vector.load %arg8[%73, %c0_44, %c0_45] : memref<8x2x32xf32, #tpu.memory_space<vmem>>, vector<1x2x32xf32>
    %75 = vector.shape_cast %74 : vector<1x2x32xf32> to vector<2x32xf32>
    %cst_46 = arith.constant dense<0.000000e+00> : vector<2x32xf32>
    %76 = tpu.matmul %68, %11, %cst_46 {dimension_numbers = #tpu.dot_dimension_numbers<[1], [0], [0], [1], [0, 0, 1, 1], [], []>} : vector<2x32xf32>, vector<32x32xf32>, vector<2x32xf32> -> vector<2x32xf32>
    %77 = arith.addf %75, %76 : vector<2x32xf32>
    %78 = math.tanh %77 : vector<2x32xf32>
    %79 = arith.index_cast %c6_i32 : i32 to index
    %c0_47 = arith.constant 0 : index
    %c0_48 = arith.constant 0 : index
    %80 = vector.load %arg8[%79, %c0_47, %c0_48] : memref<8x2x32xf32, #tpu.memory_space<vmem>>, vector<1x2x32xf32>
    %81 = vector.shape_cast %80 : vector<1x2x32xf32> to vector<2x32xf32>
    %82 = vector.shape_cast %78 : vector<2x32xf32> to vector<1x2x32xf32>
    tpu.vector_store %arg8[%79, %c0_47, %c0_48], %82 {strides = array<i32>} : memref<8x2x32xf32, #tpu.memory_space<vmem>>, vector<1x2x32xf32>,
    %c7_i32 = arith.constant 7 : i32
    %83 = arith.index_cast %c7_i32 : i32 to index
    %c0_49 = arith.constant 0 : index
    %c0_50 = arith.constant 0 : index
    %84 = vector.load %arg8[%83, %c0_49, %c0_50] : memref<8x2x32xf32, #tpu.memory_space<vmem>>, vector<1x2x32xf32>
    %85 = vector.shape_cast %84 : vector<1x2x32xf32> to vector<2x32xf32>
    %cst_51 = arith.constant dense<0.000000e+00> : vector<2x32xf32>
    %86 = tpu.matmul %78, %11, %cst_51 {dimension_numbers = #tpu.dot_dimension_numbers<[1], [0], [0], [1], [0, 0, 1, 1], [], []>} : vector<2x32xf32>, vector<32x32xf32>, vector<2x32xf32> -> vector<2x32xf32>
    %87 = arith.addf %85, %86 : vector<2x32xf32>
    %88 = math.tanh %87 : vector<2x32xf32>
    %89 = arith.index_cast %c7_i32 : i32 to index
    %c0_52 = arith.constant 0 : index
    %c0_53 = arith.constant 0 : index
    %90 = vector.load %arg8[%89, %c0_52, %c0_53] : memref<8x2x32xf32, #tpu.memory_space<vmem>>, vector<1x2x32xf32>
    %91 = vector.shape_cast %90 : vector<1x2x32xf32> to vector<2x32xf32>
    %92 = vector.shape_cast %88 : vector<2x32xf32> to vector<1x2x32xf32>
    tpu.vector_store %arg8[%89, %c0_52, %c0_53], %92 {strides = array<i32>} : memref<8x2x32xf32, #tpu.memory_space<vmem>>, vector<1x2x32xf32>,
    %c8_i32 = arith.constant 8 : i32
    %c0_54 = arith.constant 0 : index
    %c0_55 = arith.constant 0 : index
    %c0_56 = arith.constant 0 : index
    %93 = vector.load %arg8[%c0_54, %c0_55, %c0_56] : memref<8x2x32xf32, #tpu.memory_space<vmem>>, vector<8x2x32xf32>
    %94 = vector.shape_cast %93 : vector<8x2x32xf32> to vector<16x32xf32>
    %c0_57 = arith.constant 0 : index
    %c0_58 = arith.constant 0 : index
    %c0_59 = arith.constant 0 : index
    %95 = vector.load %arg2[%c0_57, %c0_58, %c0_59] : memref<4x32x32xf32, #tpu.memory_space<vmem>>, vector<1x32x32xf32>
    %96 = vector.shape_cast %95 : vector<1x32x32xf32> to vector<32x32xf32>
    %cst_60 = arith.constant dense<0.000000e+00> : vector<16x32xf32>
    %97 = tpu.matmul %94, %96, %cst_60 {dimension_numbers = #tpu.dot_dimension_numbers<[1], [0], [0], [1], [0, 0, 1, 1], [], []>} : vector<16x32xf32>, vector<32x32xf32>, vector<16x32xf32> -> vector<16x32xf32>
    %c1 = arith.constant 1 : index
    %c0_61 = arith.constant 0 : index
    %c0_62 = arith.constant 0 : index
    %98 = vector.load %arg4[%c1, %c0_61, %c0_62] : memref<5x1x32xf32, #tpu.memory_space<vmem>>, vector<1x1x32xf32>
    %99 = vector.shape_cast %98 : vector<1x1x32xf32> to vector<1x32xf32>
    %100 = vector.broadcast %99 : vector<1x32xf32> to vector<16x32xf32>
    %101 = arith.addf %97, %100 : vector<16x32xf32>
    %102 = vector.shape_cast %101 : vector<16x32xf32> to vector<8x2x32xf32>
    %c0_63 = arith.constant 0 : index
    %c0_64 = arith.constant 0 : index
    %c0_65 = arith.constant 0 : index
    %103 = vector.load %arg8[%c0_63, %c0_64, %c0_65] : memref<8x2x32xf32, #tpu.memory_space<vmem>>, vector<8x2x32xf32>
    tpu.vector_store %arg8[%c0_63, %c0_64, %c0_65], %102 {strides = array<i32>} : memref<8x2x32xf32, #tpu.memory_space<vmem>>, vector<8x2x32xf32>,
    %c1_66 = arith.constant 1 : index
    %c0_67 = arith.constant 0 : index
    %c0_68 = arith.constant 0 : index
    %104 = vector.load %arg3[%c1_66, %c0_67, %c0_68] : memref<5x32x32xf32, #tpu.memory_space<vmem>>, vector<1x32x32xf32>
    %105 = vector.shape_cast %104 : vector<1x32x32xf32> to vector<32x32xf32>
    %cst_69 = arith.constant 0.000000e+00 : f32
    %106 = vector.broadcast %cst_69 : f32 to vector<2x32xf32>
    %c0_i32_70 = arith.constant 0 : i32
    %107 = arith.index_cast %c0_i32_70 : i32 to index
    %c0_71 = arith.constant 0 : index
    %c0_72 = arith.constant 0 : index
    %108 = vector.load %arg8[%107, %c0_71, %c0_72] : memref<8x2x32xf32, #tpu.memory_space<vmem>>, vector<1x2x32xf32>
    %109 = vector.shape_cast %108 : vector<1x2x32xf32> to vector<2x32xf32>
    %cst_73 = arith.constant dense<0.000000e+00> : vector<2x32xf32>
    %110 = tpu.matmul %106, %105, %cst_73 {dimension_numbers = #tpu.dot_dimension_numbers<[1], [0], [0], [1], [0, 0, 1, 1], [], []>} : vector<2x32xf32>, vector<32x32xf32>, vector<2x32xf32> -> vector<2x32xf32>
    %111 = arith.addf %109, %110 : vector<2x32xf32>
    %112 = math.tanh %111 : vector<2x32xf32>
    %113 = arith.index_cast %c0_i32_70 : i32 to index
    %c0_74 = arith.constant 0 : index
    %c0_75 = arith.constant 0 : index
    %114 = vector.load %arg8[%113, %c0_74, %c0_75] : memref<8x2x32xf32, #tpu.memory_space<vmem>>, vector<1x2x32xf32>
    %115 = vector.shape_cast %114 : vector<1x2x32xf32> to vector<2x32xf32>
    %116 = vector.shape_cast %112 : vector<2x32xf32> to vector<1x2x32xf32>
    tpu.vector_store %arg8[%113, %c0_74, %c0_75], %116 {strides = array<i32>} : memref<8x2x32xf32, #tpu.memory_space<vmem>>, vector<1x2x32xf32>,
    %c1_i32_76 = arith.constant 1 : i32
    %117 = arith.index_cast %c1_i32_76 : i32 to index
    %c0_77 = arith.constant 0 : index
    %c0_78 = arith.constant 0 : index
    %118 = vector.load %arg8[%117, %c0_77, %c0_78] : memref<8x2x32xf32, #tpu.memory_space<vmem>>, vector<1x2x32xf32>
    %119 = vector.shape_cast %118 : vector<1x2x32xf32> to vector<2x32xf32>
    %cst_79 = arith.constant dense<0.000000e+00> : vector<2x32xf32>
    %120 = tpu.matmul %112, %105, %cst_79 {dimension_numbers = #tpu.dot_dimension_numbers<[1], [0], [0], [1], [0, 0, 1, 1], [], []>} : vector<2x32xf32>, vector<32x32xf32>, vector<2x32xf32> -> vector<2x32xf32>
    %121 = arith.addf %119, %120 : vector<2x32xf32>
    %122 = math.tanh %121 : vector<2x32xf32>
    %123 = arith.index_cast %c1_i32_76 : i32 to index
    %c0_80 = arith.constant 0 : index
    %c0_81 = arith.constant 0 : index
    %124 = vector.load %arg8[%123, %c0_80, %c0_81] : memref<8x2x32xf32, #tpu.memory_space<vmem>>, vector<1x2x32xf32>
    %125 = vector.shape_cast %124 : vector<1x2x32xf32> to vector<2x32xf32>
    %126 = vector.shape_cast %122 : vector<2x32xf32> to vector<1x2x32xf32>
    tpu.vector_store %arg8[%123, %c0_80, %c0_81], %126 {strides = array<i32>} : memref<8x2x32xf32, #tpu.memory_space<vmem>>, vector<1x2x32xf32>,
    %c2_i32_82 = arith.constant 2 : i32
    %127 = arith.index_cast %c2_i32_82 : i32 to index
    %c0_83 = arith.constant 0 : index
    %c0_84 = arith.constant 0 : index
    %128 = vector.load %arg8[%127, %c0_83, %c0_84] : memref<8x2x32xf32, #tpu.memory_space<vmem>>, vector<1x2x32xf32>
    %129 = vector.shape_cast %128 : vector<1x2x32xf32> to vector<2x32xf32>
    %cst_85 = arith.constant dense<0.000000e+00> : vector<2x32xf32>
    %130 = tpu.matmul %122, %105, %cst_85 {dimension_numbers = #tpu.dot_dimension_numbers<[1], [0], [0], [1], [0, 0, 1, 1], [], []>} : vector<2x32xf32>, vector<32x32xf32>, vector<2x32xf32> -> vector<2x32xf32>
    %131 = arith.addf %129, %130 : vector<2x32xf32>
    %132 = math.tanh %131 : vector<2x32xf32>
    %133 = arith.index_cast %c2_i32_82 : i32 to index
    %c0_86 = arith.constant 0 : index
    %c0_87 = arith.constant 0 : index
    %134 = vector.load %arg8[%133, %c0_86, %c0_87] : memref<8x2x32xf32, #tpu.memory_space<vmem>>, vector<1x2x32xf32>
    %135 = vector.shape_cast %134 : vector<1x2x32xf32> to vector<2x32xf32>
    %136 = vector.shape_cast %132 : vector<2x32xf32> to vector<1x2x32xf32>
    tpu.vector_store %arg8[%133, %c0_86, %c0_87], %136 {strides = array<i32>} : memref<8x2x32xf32, #tpu.memory_space<vmem>>, vector<1x2x32xf32>,
    %c3_i32_88 = arith.constant 3 : i32
    %137 = arith.index_cast %c3_i32_88 : i32 to index
    %c0_89 = arith.constant 0 : index
    %c0_90 = arith.constant 0 : index
    %138 = vector.load %arg8[%137, %c0_89, %c0_90] : memref<8x2x32xf32, #tpu.memory_space<vmem>>, vector<1x2x32xf32>
    %139 = vector.shape_cast %138 : vector<1x2x32xf32> to vector<2x32xf32>
    %cst_91 = arith.constant dense<0.000000e+00> : vector<2x32xf32>
    %140 = tpu.matmul %132, %105, %cst_91 {dimension_numbers = #tpu.dot_dimension_numbers<[1], [0], [0], [1], [0, 0, 1, 1], [], []>} : vector<2x32xf32>, vector<32x32xf32>, vector<2x32xf32> -> vector<2x32xf32>
    %141 = arith.addf %139, %140 : vector<2x32xf32>
    %142 = math.tanh %141 : vector<2x32xf32>
    %143 = arith.index_cast %c3_i32_88 : i32 to index
    %c0_92 = arith.constant 0 : index
    %c0_93 = arith.constant 0 : index
    %144 = vector.load %arg8[%143, %c0_92, %c0_93] : memref<8x2x32xf32, #tpu.memory_space<vmem>>, vector<1x2x32xf32>
    %145 = vector.shape_cast %144 : vector<1x2x32xf32> to vector<2x32xf32>
    %146 = vector.shape_cast %142 : vector<2x32xf32> to vector<1x2x32xf32>
    tpu.vector_store %arg8[%143, %c0_92, %c0_93], %146 {strides = array<i32>} : memref<8x2x32xf32, #tpu.memory_space<vmem>>, vector<1x2x32xf32>,
    %c4_i32_94 = arith.constant 4 : i32
    %147 = arith.index_cast %c4_i32_94 : i32 to index
    %c0_95 = arith.constant 0 : index
    %c0_96 = arith.constant 0 : index
    %148 = vector.load %arg8[%147, %c0_95, %c0_96] : memref<8x2x32xf32, #tpu.memory_space<vmem>>, vector<1x2x32xf32>
    %149 = vector.shape_cast %148 : vector<1x2x32xf32> to vector<2x32xf32>
    %cst_97 = arith.constant dense<0.000000e+00> : vector<2x32xf32>
    %150 = tpu.matmul %142, %105, %cst_97 {dimension_numbers = #tpu.dot_dimension_numbers<[1], [0], [0], [1], [0, 0, 1, 1], [], []>} : vector<2x32xf32>, vector<32x32xf32>, vector<2x32xf32> -> vector<2x32xf32>
    %151 = arith.addf %149, %150 : vector<2x32xf32>
    %152 = math.tanh %151 : vector<2x32xf32>
    %153 = arith.index_cast %c4_i32_94 : i32 to index
    %c0_98 = arith.constant 0 : index
    %c0_99 = arith.constant 0 : index
    %154 = vector.load %arg8[%153, %c0_98, %c0_99] : memref<8x2x32xf32, #tpu.memory_space<vmem>>, vector<1x2x32xf32>
    %155 = vector.shape_cast %154 : vector<1x2x32xf32> to vector<2x32xf32>
    %156 = vector.shape_cast %152 : vector<2x32xf32> to vector<1x2x32xf32>
    tpu.vector_store %arg8[%153, %c0_98, %c0_99], %156 {strides = array<i32>} : memref<8x2x32xf32, #tpu.memory_space<vmem>>, vector<1x2x32xf32>,
    %c5_i32_100 = arith.constant 5 : i32
    %157 = arith.index_cast %c5_i32_100 : i32 to index
    %c0_101 = arith.constant 0 : index
    %c0_102 = arith.constant 0 : index
    %158 = vector.load %arg8[%157, %c0_101, %c0_102] : memref<8x2x32xf32, #tpu.memory_space<vmem>>, vector<1x2x32xf32>
    %159 = vector.shape_cast %158 : vector<1x2x32xf32> to vector<2x32xf32>
    %cst_103 = arith.constant dense<0.000000e+00> : vector<2x32xf32>
    %160 = tpu.matmul %152, %105, %cst_103 {dimension_numbers = #tpu.dot_dimension_numbers<[1], [0], [0], [1], [0, 0, 1, 1], [], []>} : vector<2x32xf32>, vector<32x32xf32>, vector<2x32xf32> -> vector<2x32xf32>
    %161 = arith.addf %159, %160 : vector<2x32xf32>
    %162 = math.tanh %161 : vector<2x32xf32>
    %163 = arith.index_cast %c5_i32_100 : i32 to index
    %c0_104 = arith.constant 0 : index
    %c0_105 = arith.constant 0 : index
    %164 = vector.load %arg8[%163, %c0_104, %c0_105] : memref<8x2x32xf32, #tpu.memory_space<vmem>>, vector<1x2x32xf32>
    %165 = vector.shape_cast %164 : vector<1x2x32xf32> to vector<2x32xf32>
    %166 = vector.shape_cast %162 : vector<2x32xf32> to vector<1x2x32xf32>
    tpu.vector_store %arg8[%163, %c0_104, %c0_105], %166 {strides = array<i32>} : memref<8x2x32xf32, #tpu.memory_space<vmem>>, vector<1x2x32xf32>,
    %c6_i32_106 = arith.constant 6 : i32
    %167 = arith.index_cast %c6_i32_106 : i32 to index
    %c0_107 = arith.constant 0 : index
    %c0_108 = arith.constant 0 : index
    %168 = vector.load %arg8[%167, %c0_107, %c0_108] : memref<8x2x32xf32, #tpu.memory_space<vmem>>, vector<1x2x32xf32>
    %169 = vector.shape_cast %168 : vector<1x2x32xf32> to vector<2x32xf32>
    %cst_109 = arith.constant dense<0.000000e+00> : vector<2x32xf32>
    %170 = tpu.matmul %162, %105, %cst_109 {dimension_numbers = #tpu.dot_dimension_numbers<[1], [0], [0], [1], [0, 0, 1, 1], [], []>} : vector<2x32xf32>, vector<32x32xf32>, vector<2x32xf32> -> vector<2x32xf32>
    %171 = arith.addf %169, %170 : vector<2x32xf32>
    %172 = math.tanh %171 : vector<2x32xf32>
    %173 = arith.index_cast %c6_i32_106 : i32 to index
    %c0_110 = arith.constant 0 : index
    %c0_111 = arith.constant 0 : index
    %174 = vector.load %arg8[%173, %c0_110, %c0_111] : memref<8x2x32xf32, #tpu.memory_space<vmem>>, vector<1x2x32xf32>
    %175 = vector.shape_cast %174 : vector<1x2x32xf32> to vector<2x32xf32>
    %176 = vector.shape_cast %172 : vector<2x32xf32> to vector<1x2x32xf32>
    tpu.vector_store %arg8[%173, %c0_110, %c0_111], %176 {strides = array<i32>} : memref<8x2x32xf32, #tpu.memory_space<vmem>>, vector<1x2x32xf32>,
    %c7_i32_112 = arith.constant 7 : i32
    %177 = arith.index_cast %c7_i32_112 : i32 to index
    %c0_113 = arith.constant 0 : index
    %c0_114 = arith.constant 0 : index
    %178 = vector.load %arg8[%177, %c0_113, %c0_114] : memref<8x2x32xf32, #tpu.memory_space<vmem>>, vector<1x2x32xf32>
    %179 = vector.shape_cast %178 : vector<1x2x32xf32> to vector<2x32xf32>
    %cst_115 = arith.constant dense<0.000000e+00> : vector<2x32xf32>
    %180 = tpu.matmul %172, %105, %cst_115 {dimension_numbers = #tpu.dot_dimension_numbers<[1], [0], [0], [1], [0, 0, 1, 1], [], []>} : vector<2x32xf32>, vector<32x32xf32>, vector<2x32xf32> -> vector<2x32xf32>
    %181 = arith.addf %179, %180 : vector<2x32xf32>
    %182 = math.tanh %181 : vector<2x32xf32>
    %183 = arith.index_cast %c7_i32_112 : i32 to index
    %c0_116 = arith.constant 0 : index
    %c0_117 = arith.constant 0 : index
    %184 = vector.load %arg8[%183, %c0_116, %c0_117] : memref<8x2x32xf32, #tpu.memory_space<vmem>>, vector<1x2x32xf32>
    %185 = vector.shape_cast %184 : vector<1x2x32xf32> to vector<2x32xf32>
    %186 = vector.shape_cast %182 : vector<2x32xf32> to vector<1x2x32xf32>
    tpu.vector_store %arg8[%183, %c0_116, %c0_117], %186 {strides = array<i32>} : memref<8x2x32xf32, #tpu.memory_space<vmem>>, vector<1x2x32xf32>,
    %c8_i32_118 = arith.constant 8 : i32
    %c0_119 = arith.constant 0 : index
    %c0_120 = arith.constant 0 : index
    %c0_121 = arith.constant 0 : index
    %187 = vector.load %arg8[%c0_119, %c0_120, %c0_121] : memref<8x2x32xf32, #tpu.memory_space<vmem>>, vector<8x2x32xf32>
    %188 = vector.shape_cast %187 : vector<8x2x32xf32> to vector<16x32xf32>
    %c1_122 = arith.constant 1 : index
    %c0_123 = arith.constant 0 : index
    %c0_124 = arith.constant 0 : index
    %189 = vector.load %arg2[%c1_122, %c0_123, %c0_124] : memref<4x32x32xf32, #tpu.memory_space<vmem>>, vector<1x32x32xf32>
    %190 = vector.shape_cast %189 : vector<1x32x32xf32> to vector<32x32xf32>
    %cst_125 = arith.constant dense<0.000000e+00> : vector<16x32xf32>
    %191 = tpu.matmul %188, %190, %cst_125 {dimension_numbers = #tpu.dot_dimension_numbers<[1], [0], [0], [1], [0, 0, 1, 1], [], []>} : vector<16x32xf32>, vector<32x32xf32>, vector<16x32xf32> -> vector<16x32xf32>
    %c2 = arith.constant 2 : index
    %c0_126 = arith.constant 0 : index
    %c0_127 = arith.constant 0 : index
    %192 = vector.load %arg4[%c2, %c0_126, %c0_127] : memref<5x1x32xf32, #tpu.memory_space<vmem>>, vector<1x1x32xf32>
    %193 = vector.shape_cast %192 : vector<1x1x32xf32> to vector<1x32xf32>
    %194 = vector.broadcast %193 : vector<1x32xf32> to vector<16x32xf32>
    %195 = arith.addf %191, %194 : vector<16x32xf32>
    %196 = vector.shape_cast %195 : vector<16x32xf32> to vector<8x2x32xf32>
    %c0_128 = arith.constant 0 : index
    %c0_129 = arith.constant 0 : index
    %c0_130 = arith.constant 0 : index
    %197 = vector.load %arg8[%c0_128, %c0_129, %c0_130] : memref<8x2x32xf32, #tpu.memory_space<vmem>>, vector<8x2x32xf32>
    tpu.vector_store %arg8[%c0_128, %c0_129, %c0_130], %196 {strides = array<i32>} : memref<8x2x32xf32, #tpu.memory_space<vmem>>, vector<8x2x32xf32>,
    %c2_131 = arith.constant 2 : index
    %c0_132 = arith.constant 0 : index
    %c0_133 = arith.constant 0 : index
    %198 = vector.load %arg3[%c2_131, %c0_132, %c0_133] : memref<5x32x32xf32, #tpu.memory_space<vmem>>, vector<1x32x32xf32>
    %199 = vector.shape_cast %198 : vector<1x32x32xf32> to vector<32x32xf32>
    %cst_134 = arith.constant 0.000000e+00 : f32
    %200 = vector.broadcast %cst_134 : f32 to vector<2x32xf32>
    %c0_i32_135 = arith.constant 0 : i32
    %201 = arith.index_cast %c0_i32_135 : i32 to index
    %c0_136 = arith.constant 0 : index
    %c0_137 = arith.constant 0 : index
    %202 = vector.load %arg8[%201, %c0_136, %c0_137] : memref<8x2x32xf32, #tpu.memory_space<vmem>>, vector<1x2x32xf32>
    %203 = vector.shape_cast %202 : vector<1x2x32xf32> to vector<2x32xf32>
    %cst_138 = arith.constant dense<0.000000e+00> : vector<2x32xf32>
    %204 = tpu.matmul %200, %199, %cst_138 {dimension_numbers = #tpu.dot_dimension_numbers<[1], [0], [0], [1], [0, 0, 1, 1], [], []>} : vector<2x32xf32>, vector<32x32xf32>, vector<2x32xf32> -> vector<2x32xf32>
    %205 = arith.addf %203, %204 : vector<2x32xf32>
    %206 = math.tanh %205 : vector<2x32xf32>
    %207 = arith.index_cast %c0_i32_135 : i32 to index
    %c0_139 = arith.constant 0 : index
    %c0_140 = arith.constant 0 : index
    %208 = vector.load %arg8[%207, %c0_139, %c0_140] : memref<8x2x32xf32, #tpu.memory_space<vmem>>, vector<1x2x32xf32>
    %209 = vector.shape_cast %208 : vector<1x2x32xf32> to vector<2x32xf32>
    %210 = vector.shape_cast %206 : vector<2x32xf32> to vector<1x2x32xf32>
    tpu.vector_store %arg8[%207, %c0_139, %c0_140], %210 {strides = array<i32>} : memref<8x2x32xf32, #tpu.memory_space<vmem>>, vector<1x2x32xf32>,
    %c1_i32_141 = arith.constant 1 : i32
    %211 = arith.index_cast %c1_i32_141 : i32 to index
    %c0_142 = arith.constant 0 : index
    %c0_143 = arith.constant 0 : index
    %212 = vector.load %arg8[%211, %c0_142, %c0_143] : memref<8x2x32xf32, #tpu.memory_space<vmem>>, vector<1x2x32xf32>
    %213 = vector.shape_cast %212 : vector<1x2x32xf32> to vector<2x32xf32>
    %cst_144 = arith.constant dense<0.000000e+00> : vector<2x32xf32>
    %214 = tpu.matmul %206, %199, %cst_144 {dimension_numbers = #tpu.dot_dimension_numbers<[1], [0], [0], [1], [0, 0, 1, 1], [], []>} : vector<2x32xf32>, vector<32x32xf32>, vector<2x32xf32> -> vector<2x32xf32>
    %215 = arith.addf %213, %214 : vector<2x32xf32>
    %216 = math.tanh %215 : vector<2x32xf32>
    %217 = arith.index_cast %c1_i32_141 : i32 to index
    %c0_145 = arith.constant 0 : index
    %c0_146 = arith.constant 0 : index
    %218 = vector.load %arg8[%217, %c0_145, %c0_146] : memref<8x2x32xf32, #tpu.memory_space<vmem>>, vector<1x2x32xf32>
    %219 = vector.shape_cast %218 : vector<1x2x32xf32> to vector<2x32xf32>
    %220 = vector.shape_cast %216 : vector<2x32xf32> to vector<1x2x32xf32>
    tpu.vector_store %arg8[%217, %c0_145, %c0_146], %220 {strides = array<i32>} : memref<8x2x32xf32, #tpu.memory_space<vmem>>, vector<1x2x32xf32>,
    %c2_i32_147 = arith.constant 2 : i32
    %221 = arith.index_cast %c2_i32_147 : i32 to index
    %c0_148 = arith.constant 0 : index
    %c0_149 = arith.constant 0 : index
    %222 = vector.load %arg8[%221, %c0_148, %c0_149] : memref<8x2x32xf32, #tpu.memory_space<vmem>>, vector<1x2x32xf32>
    %223 = vector.shape_cast %222 : vector<1x2x32xf32> to vector<2x32xf32>
    %cst_150 = arith.constant dense<0.000000e+00> : vector<2x32xf32>
    %224 = tpu.matmul %216, %199, %cst_150 {dimension_numbers = #tpu.dot_dimension_numbers<[1], [0], [0], [1], [0, 0, 1, 1], [], []>} : vector<2x32xf32>, vector<32x32xf32>, vector<2x32xf32> -> vector<2x32xf32>
    %225 = arith.addf %223, %224 : vector<2x32xf32>
    %226 = math.tanh %225 : vector<2x32xf32>
    %227 = arith.index_cast %c2_i32_147 : i32 to index
    %c0_151 = arith.constant 0 : index
    %c0_152 = arith.constant 0 : index
    %228 = vector.load %arg8[%227, %c0_151, %c0_152] : memref<8x2x32xf32, #tpu.memory_space<vmem>>, vector<1x2x32xf32>
    %229 = vector.shape_cast %228 : vector<1x2x32xf32> to vector<2x32xf32>
    %230 = vector.shape_cast %226 : vector<2x32xf32> to vector<1x2x32xf32>
    tpu.vector_store %arg8[%227, %c0_151, %c0_152], %230 {strides = array<i32>} : memref<8x2x32xf32, #tpu.memory_space<vmem>>, vector<1x2x32xf32>,
    %c3_i32_153 = arith.constant 3 : i32
    %231 = arith.index_cast %c3_i32_153 : i32 to index
    %c0_154 = arith.constant 0 : index
    %c0_155 = arith.constant 0 : index
    %232 = vector.load %arg8[%231, %c0_154, %c0_155] : memref<8x2x32xf32, #tpu.memory_space<vmem>>, vector<1x2x32xf32>
    %233 = vector.shape_cast %232 : vector<1x2x32xf32> to vector<2x32xf32>
    %cst_156 = arith.constant dense<0.000000e+00> : vector<2x32xf32>
    %234 = tpu.matmul %226, %199, %cst_156 {dimension_numbers = #tpu.dot_dimension_numbers<[1], [0], [0], [1], [0, 0, 1, 1], [], []>} : vector<2x32xf32>, vector<32x32xf32>, vector<2x32xf32> -> vector<2x32xf32>
    %235 = arith.addf %233, %234 : vector<2x32xf32>
    %236 = math.tanh %235 : vector<2x32xf32>
    %237 = arith.index_cast %c3_i32_153 : i32 to index
    %c0_157 = arith.constant 0 : index
    %c0_158 = arith.constant 0 : index
    %238 = vector.load %arg8[%237, %c0_157, %c0_158] : memref<8x2x32xf32, #tpu.memory_space<vmem>>, vector<1x2x32xf32>
    %239 = vector.shape_cast %238 : vector<1x2x32xf32> to vector<2x32xf32>
    %240 = vector.shape_cast %236 : vector<2x32xf32> to vector<1x2x32xf32>
    tpu.vector_store %arg8[%237, %c0_157, %c0_158], %240 {strides = array<i32>} : memref<8x2x32xf32, #tpu.memory_space<vmem>>, vector<1x2x32xf32>,
    %c4_i32_159 = arith.constant 4 : i32
    %241 = arith.index_cast %c4_i32_159 : i32 to index
    %c0_160 = arith.constant 0 : index
    %c0_161 = arith.constant 0 : index
    %242 = vector.load %arg8[%241, %c0_160, %c0_161] : memref<8x2x32xf32, #tpu.memory_space<vmem>>, vector<1x2x32xf32>
    %243 = vector.shape_cast %242 : vector<1x2x32xf32> to vector<2x32xf32>
    %cst_162 = arith.constant dense<0.000000e+00> : vector<2x32xf32>
    %244 = tpu.matmul %236, %199, %cst_162 {dimension_numbers = #tpu.dot_dimension_numbers<[1], [0], [0], [1], [0, 0, 1, 1], [], []>} : vector<2x32xf32>, vector<32x32xf32>, vector<2x32xf32> -> vector<2x32xf32>
    %245 = arith.addf %243, %244 : vector<2x32xf32>
    %246 = math.tanh %245 : vector<2x32xf32>
    %247 = arith.index_cast %c4_i32_159 : i32 to index
    %c0_163 = arith.constant 0 : index
    %c0_164 = arith.constant 0 : index
    %248 = vector.load %arg8[%247, %c0_163, %c0_164] : memref<8x2x32xf32, #tpu.memory_space<vmem>>, vector<1x2x32xf32>
    %249 = vector.shape_cast %248 : vector<1x2x32xf32> to vector<2x32xf32>
    %250 = vector.shape_cast %246 : vector<2x32xf32> to vector<1x2x32xf32>
    tpu.vector_store %arg8[%247, %c0_163, %c0_164], %250 {strides = array<i32>} : memref<8x2x32xf32, #tpu.memory_space<vmem>>, vector<1x2x32xf32>,
    %c5_i32_165 = arith.constant 5 : i32
    %251 = arith.index_cast %c5_i32_165 : i32 to index
    %c0_166 = arith.constant 0 : index
    %c0_167 = arith.constant 0 : index
    %252 = vector.load %arg8[%251, %c0_166, %c0_167] : memref<8x2x32xf32, #tpu.memory_space<vmem>>, vector<1x2x32xf32>
    %253 = vector.shape_cast %252 : vector<1x2x32xf32> to vector<2x32xf32>
    %cst_168 = arith.constant dense<0.000000e+00> : vector<2x32xf32>
    %254 = tpu.matmul %246, %199, %cst_168 {dimension_numbers = #tpu.dot_dimension_numbers<[1], [0], [0], [1], [0, 0, 1, 1], [], []>} : vector<2x32xf32>, vector<32x32xf32>, vector<2x32xf32> -> vector<2x32xf32>
    %255 = arith.addf %253, %254 : vector<2x32xf32>
    %256 = math.tanh %255 : vector<2x32xf32>
    %257 = arith.index_cast %c5_i32_165 : i32 to index
    %c0_169 = arith.constant 0 : index
    %c0_170 = arith.constant 0 : index
    %258 = vector.load %arg8[%257, %c0_169, %c0_170] : memref<8x2x32xf32, #tpu.memory_space<vmem>>, vector<1x2x32xf32>
    %259 = vector.shape_cast %258 : vector<1x2x32xf32> to vector<2x32xf32>
    %260 = vector.shape_cast %256 : vector<2x32xf32> to vector<1x2x32xf32>
    tpu.vector_store %arg8[%257, %c0_169, %c0_170], %260 {strides = array<i32>} : memref<8x2x32xf32, #tpu.memory_space<vmem>>, vector<1x2x32xf32>,
    %c6_i32_171 = arith.constant 6 : i32
    %261 = arith.index_cast %c6_i32_171 : i32 to index
    %c0_172 = arith.constant 0 : index
    %c0_173 = arith.constant 0 : index
    %262 = vector.load %arg8[%261, %c0_172, %c0_173] : memref<8x2x32xf32, #tpu.memory_space<vmem>>, vector<1x2x32xf32>
    %263 = vector.shape_cast %262 : vector<1x2x32xf32> to vector<2x32xf32>
    %cst_174 = arith.constant dense<0.000000e+00> : vector<2x32xf32>
    %264 = tpu.matmul %256, %199, %cst_174 {dimension_numbers = #tpu.dot_dimension_numbers<[1], [0], [0], [1], [0, 0, 1, 1], [], []>} : vector<2x32xf32>, vector<32x32xf32>, vector<2x32xf32> -> vector<2x32xf32>
    %265 = arith.addf %263, %264 : vector<2x32xf32>
    %266 = math.tanh %265 : vector<2x32xf32>
    %267 = arith.index_cast %c6_i32_171 : i32 to index
    %c0_175 = arith.constant 0 : index
    %c0_176 = arith.constant 0 : index
    %268 = vector.load %arg8[%267, %c0_175, %c0_176] : memref<8x2x32xf32, #tpu.memory_space<vmem>>, vector<1x2x32xf32>
    %269 = vector.shape_cast %268 : vector<1x2x32xf32> to vector<2x32xf32>
    %270 = vector.shape_cast %266 : vector<2x32xf32> to vector<1x2x32xf32>
    tpu.vector_store %arg8[%267, %c0_175, %c0_176], %270 {strides = array<i32>} : memref<8x2x32xf32, #tpu.memory_space<vmem>>, vector<1x2x32xf32>,
    %c7_i32_177 = arith.constant 7 : i32
    %271 = arith.index_cast %c7_i32_177 : i32 to index
    %c0_178 = arith.constant 0 : index
    %c0_179 = arith.constant 0 : index
    %272 = vector.load %arg8[%271, %c0_178, %c0_179] : memref<8x2x32xf32, #tpu.memory_space<vmem>>, vector<1x2x32xf32>
    %273 = vector.shape_cast %272 : vector<1x2x32xf32> to vector<2x32xf32>
    %cst_180 = arith.constant dense<0.000000e+00> : vector<2x32xf32>
    %274 = tpu.matmul %266, %199, %cst_180 {dimension_numbers = #tpu.dot_dimension_numbers<[1], [0], [0], [1], [0, 0, 1, 1], [], []>} : vector<2x32xf32>, vector<32x32xf32>, vector<2x32xf32> -> vector<2x32xf32>
    %275 = arith.addf %273, %274 : vector<2x32xf32>
    %276 = math.tanh %275 : vector<2x32xf32>
    %277 = arith.index_cast %c7_i32_177 : i32 to index
    %c0_181 = arith.constant 0 : index
    %c0_182 = arith.constant 0 : index
    %278 = vector.load %arg8[%277, %c0_181, %c0_182] : memref<8x2x32xf32, #tpu.memory_space<vmem>>, vector<1x2x32xf32>
    %279 = vector.shape_cast %278 : vector<1x2x32xf32> to vector<2x32xf32>
    %280 = vector.shape_cast %276 : vector<2x32xf32> to vector<1x2x32xf32>
    tpu.vector_store %arg8[%277, %c0_181, %c0_182], %280 {strides = array<i32>} : memref<8x2x32xf32, #tpu.memory_space<vmem>>, vector<1x2x32xf32>,
    %c8_i32_183 = arith.constant 8 : i32
    %c0_184 = arith.constant 0 : index
    %c0_185 = arith.constant 0 : index
    %c0_186 = arith.constant 0 : index
    %281 = vector.load %arg8[%c0_184, %c0_185, %c0_186] : memref<8x2x32xf32, #tpu.memory_space<vmem>>, vector<8x2x32xf32>
    %282 = vector.shape_cast %281 : vector<8x2x32xf32> to vector<16x32xf32>
    %c2_187 = arith.constant 2 : index
    %c0_188 = arith.constant 0 : index
    %c0_189 = arith.constant 0 : index
    %283 = vector.load %arg2[%c2_187, %c0_188, %c0_189] : memref<4x32x32xf32, #tpu.memory_space<vmem>>, vector<1x32x32xf32>
    %284 = vector.shape_cast %283 : vector<1x32x32xf32> to vector<32x32xf32>
    %cst_190 = arith.constant dense<0.000000e+00> : vector<16x32xf32>
    %285 = tpu.matmul %282, %284, %cst_190 {dimension_numbers = #tpu.dot_dimension_numbers<[1], [0], [0], [1], [0, 0, 1, 1], [], []>} : vector<16x32xf32>, vector<32x32xf32>, vector<16x32xf32> -> vector<16x32xf32>
    %c3 = arith.constant 3 : index
    %c0_191 = arith.constant 0 : index
    %c0_192 = arith.constant 0 : index
    %286 = vector.load %arg4[%c3, %c0_191, %c0_192] : memref<5x1x32xf32, #tpu.memory_space<vmem>>, vector<1x1x32xf32>
    %287 = vector.shape_cast %286 : vector<1x1x32xf32> to vector<1x32xf32>
    %288 = vector.broadcast %287 : vector<1x32xf32> to vector<16x32xf32>
    %289 = arith.addf %285, %288 : vector<16x32xf32>
    %290 = vector.shape_cast %289 : vector<16x32xf32> to vector<8x2x32xf32>
    %c0_193 = arith.constant 0 : index
    %c0_194 = arith.constant 0 : index
    %c0_195 = arith.constant 0 : index
    %291 = vector.load %arg8[%c0_193, %c0_194, %c0_195] : memref<8x2x32xf32, #tpu.memory_space<vmem>>, vector<8x2x32xf32>
    tpu.vector_store %arg8[%c0_193, %c0_194, %c0_195], %290 {strides = array<i32>} : memref<8x2x32xf32, #tpu.memory_space<vmem>>, vector<8x2x32xf32>,
    %c3_196 = arith.constant 3 : index
    %c0_197 = arith.constant 0 : index
    %c0_198 = arith.constant 0 : index
    %292 = vector.load %arg3[%c3_196, %c0_197, %c0_198] : memref<5x32x32xf32, #tpu.memory_space<vmem>>, vector<1x32x32xf32>
    %293 = vector.shape_cast %292 : vector<1x32x32xf32> to vector<32x32xf32>
    %cst_199 = arith.constant 0.000000e+00 : f32
    %294 = vector.broadcast %cst_199 : f32 to vector<2x32xf32>
    %c0_i32_200 = arith.constant 0 : i32
    %295 = arith.index_cast %c0_i32_200 : i32 to index
    %c0_201 = arith.constant 0 : index
    %c0_202 = arith.constant 0 : index
    %296 = vector.load %arg8[%295, %c0_201, %c0_202] : memref<8x2x32xf32, #tpu.memory_space<vmem>>, vector<1x2x32xf32>
    %297 = vector.shape_cast %296 : vector<1x2x32xf32> to vector<2x32xf32>
    %cst_203 = arith.constant dense<0.000000e+00> : vector<2x32xf32>
    %298 = tpu.matmul %294, %293, %cst_203 {dimension_numbers = #tpu.dot_dimension_numbers<[1], [0], [0], [1], [0, 0, 1, 1], [], []>} : vector<2x32xf32>, vector<32x32xf32>, vector<2x32xf32> -> vector<2x32xf32>
    %299 = arith.addf %297, %298 : vector<2x32xf32>
    %300 = math.tanh %299 : vector<2x32xf32>
    %301 = arith.index_cast %c0_i32_200 : i32 to index
    %c0_204 = arith.constant 0 : index
    %c0_205 = arith.constant 0 : index
    %302 = vector.load %arg8[%301, %c0_204, %c0_205] : memref<8x2x32xf32, #tpu.memory_space<vmem>>, vector<1x2x32xf32>
    %303 = vector.shape_cast %302 : vector<1x2x32xf32> to vector<2x32xf32>
    %304 = vector.shape_cast %300 : vector<2x32xf32> to vector<1x2x32xf32>
    tpu.vector_store %arg8[%301, %c0_204, %c0_205], %304 {strides = array<i32>} : memref<8x2x32xf32, #tpu.memory_space<vmem>>, vector<1x2x32xf32>,
    %c1_i32_206 = arith.constant 1 : i32
    %305 = arith.index_cast %c1_i32_206 : i32 to index
    %c0_207 = arith.constant 0 : index
    %c0_208 = arith.constant 0 : index
    %306 = vector.load %arg8[%305, %c0_207, %c0_208] : memref<8x2x32xf32, #tpu.memory_space<vmem>>, vector<1x2x32xf32>
    %307 = vector.shape_cast %306 : vector<1x2x32xf32> to vector<2x32xf32>
    %cst_209 = arith.constant dense<0.000000e+00> : vector<2x32xf32>
    %308 = tpu.matmul %300, %293, %cst_209 {dimension_numbers = #tpu.dot_dimension_numbers<[1], [0], [0], [1], [0, 0, 1, 1], [], []>} : vector<2x32xf32>, vector<32x32xf32>, vector<2x32xf32> -> vector<2x32xf32>
    %309 = arith.addf %307, %308 : vector<2x32xf32>
    %310 = math.tanh %309 : vector<2x32xf32>
    %311 = arith.index_cast %c1_i32_206 : i32 to index
    %c0_210 = arith.constant 0 : index
    %c0_211 = arith.constant 0 : index
    %312 = vector.load %arg8[%311, %c0_210, %c0_211] : memref<8x2x32xf32, #tpu.memory_space<vmem>>, vector<1x2x32xf32>
    %313 = vector.shape_cast %312 : vector<1x2x32xf32> to vector<2x32xf32>
    %314 = vector.shape_cast %310 : vector<2x32xf32> to vector<1x2x32xf32>
    tpu.vector_store %arg8[%311, %c0_210, %c0_211], %314 {strides = array<i32>} : memref<8x2x32xf32, #tpu.memory_space<vmem>>, vector<1x2x32xf32>,
    %c2_i32_212 = arith.constant 2 : i32
    %315 = arith.index_cast %c2_i32_212 : i32 to index
    %c0_213 = arith.constant 0 : index
    %c0_214 = arith.constant 0 : index
    %316 = vector.load %arg8[%315, %c0_213, %c0_214] : memref<8x2x32xf32, #tpu.memory_space<vmem>>, vector<1x2x32xf32>
    %317 = vector.shape_cast %316 : vector<1x2x32xf32> to vector<2x32xf32>
    %cst_215 = arith.constant dense<0.000000e+00> : vector<2x32xf32>
    %318 = tpu.matmul %310, %293, %cst_215 {dimension_numbers = #tpu.dot_dimension_numbers<[1], [0], [0], [1], [0, 0, 1, 1], [], []>} : vector<2x32xf32>, vector<32x32xf32>, vector<2x32xf32> -> vector<2x32xf32>
    %319 = arith.addf %317, %318 : vector<2x32xf32>
    %320 = math.tanh %319 : vector<2x32xf32>
    %321 = arith.index_cast %c2_i32_212 : i32 to index
    %c0_216 = arith.constant 0 : index
    %c0_217 = arith.constant 0 : index
    %322 = vector.load %arg8[%321, %c0_216, %c0_217] : memref<8x2x32xf32, #tpu.memory_space<vmem>>, vector<1x2x32xf32>
    %323 = vector.shape_cast %322 : vector<1x2x32xf32> to vector<2x32xf32>
    %324 = vector.shape_cast %320 : vector<2x32xf32> to vector<1x2x32xf32>
    tpu.vector_store %arg8[%321, %c0_216, %c0_217], %324 {strides = array<i32>} : memref<8x2x32xf32, #tpu.memory_space<vmem>>, vector<1x2x32xf32>,
    %c3_i32_218 = arith.constant 3 : i32
    %325 = arith.index_cast %c3_i32_218 : i32 to index
    %c0_219 = arith.constant 0 : index
    %c0_220 = arith.constant 0 : index
    %326 = vector.load %arg8[%325, %c0_219, %c0_220] : memref<8x2x32xf32, #tpu.memory_space<vmem>>, vector<1x2x32xf32>
    %327 = vector.shape_cast %326 : vector<1x2x32xf32> to vector<2x32xf32>
    %cst_221 = arith.constant dense<0.000000e+00> : vector<2x32xf32>
    %328 = tpu.matmul %320, %293, %cst_221 {dimension_numbers = #tpu.dot_dimension_numbers<[1], [0], [0], [1], [0, 0, 1, 1], [], []>} : vector<2x32xf32>, vector<32x32xf32>, vector<2x32xf32> -> vector<2x32xf32>
    %329 = arith.addf %327, %328 : vector<2x32xf32>
    %330 = math.tanh %329 : vector<2x32xf32>
    %331 = arith.index_cast %c3_i32_218 : i32 to index
    %c0_222 = arith.constant 0 : index
    %c0_223 = arith.constant 0 : index
    %332 = vector.load %arg8[%331, %c0_222, %c0_223] : memref<8x2x32xf32, #tpu.memory_space<vmem>>, vector<1x2x32xf32>
    %333 = vector.shape_cast %332 : vector<1x2x32xf32> to vector<2x32xf32>
    %334 = vector.shape_cast %330 : vector<2x32xf32> to vector<1x2x32xf32>
    tpu.vector_store %arg8[%331, %c0_222, %c0_223], %334 {strides = array<i32>} : memref<8x2x32xf32, #tpu.memory_space<vmem>>, vector<1x2x32xf32>,
    %c4_i32_224 = arith.constant 4 : i32
    %335 = arith.index_cast %c4_i32_224 : i32 to index
    %c0_225 = arith.constant 0 : index
    %c0_226 = arith.constant 0 : index
    %336 = vector.load %arg8[%335, %c0_225, %c0_226] : memref<8x2x32xf32, #tpu.memory_space<vmem>>, vector<1x2x32xf32>
    %337 = vector.shape_cast %336 : vector<1x2x32xf32> to vector<2x32xf32>
    %cst_227 = arith.constant dense<0.000000e+00> : vector<2x32xf32>
    %338 = tpu.matmul %330, %293, %cst_227 {dimension_numbers = #tpu.dot_dimension_numbers<[1], [0], [0], [1], [0, 0, 1, 1], [], []>} : vector<2x32xf32>, vector<32x32xf32>, vector<2x32xf32> -> vector<2x32xf32>
    %339 = arith.addf %337, %338 : vector<2x32xf32>
    %340 = math.tanh %339 : vector<2x32xf32>
    %341 = arith.index_cast %c4_i32_224 : i32 to index
    %c0_228 = arith.constant 0 : index
    %c0_229 = arith.constant 0 : index
    %342 = vector.load %arg8[%341, %c0_228, %c0_229] : memref<8x2x32xf32, #tpu.memory_space<vmem>>, vector<1x2x32xf32>
    %343 = vector.shape_cast %342 : vector<1x2x32xf32> to vector<2x32xf32>
    %344 = vector.shape_cast %340 : vector<2x32xf32> to vector<1x2x32xf32>
    tpu.vector_store %arg8[%341, %c0_228, %c0_229], %344 {strides = array<i32>} : memref<8x2x32xf32, #tpu.memory_space<vmem>>, vector<1x2x32xf32>,
    %c5_i32_230 = arith.constant 5 : i32
    %345 = arith.index_cast %c5_i32_230 : i32 to index
    %c0_231 = arith.constant 0 : index
    %c0_232 = arith.constant 0 : index
    %346 = vector.load %arg8[%345, %c0_231, %c0_232] : memref<8x2x32xf32, #tpu.memory_space<vmem>>, vector<1x2x32xf32>
    %347 = vector.shape_cast %346 : vector<1x2x32xf32> to vector<2x32xf32>
    %cst_233 = arith.constant dense<0.000000e+00> : vector<2x32xf32>
    %348 = tpu.matmul %340, %293, %cst_233 {dimension_numbers = #tpu.dot_dimension_numbers<[1], [0], [0], [1], [0, 0, 1, 1], [], []>} : vector<2x32xf32>, vector<32x32xf32>, vector<2x32xf32> -> vector<2x32xf32>
    %349 = arith.addf %347, %348 : vector<2x32xf32>
    %350 = math.tanh %349 : vector<2x32xf32>
    %351 = arith.index_cast %c5_i32_230 : i32 to index
    %c0_234 = arith.constant 0 : index
    %c0_235 = arith.constant 0 : index
    %352 = vector.load %arg8[%351, %c0_234, %c0_235] : memref<8x2x32xf32, #tpu.memory_space<vmem>>, vector<1x2x32xf32>
    %353 = vector.shape_cast %352 : vector<1x2x32xf32> to vector<2x32xf32>
    %354 = vector.shape_cast %350 : vector<2x32xf32> to vector<1x2x32xf32>
    tpu.vector_store %arg8[%351, %c0_234, %c0_235], %354 {strides = array<i32>} : memref<8x2x32xf32, #tpu.memory_space<vmem>>, vector<1x2x32xf32>,
    %c6_i32_236 = arith.constant 6 : i32
    %355 = arith.index_cast %c6_i32_236 : i32 to index
    %c0_237 = arith.constant 0 : index
    %c0_238 = arith.constant 0 : index
    %356 = vector.load %arg8[%355, %c0_237, %c0_238] : memref<8x2x32xf32, #tpu.memory_space<vmem>>, vector<1x2x32xf32>
    %357 = vector.shape_cast %356 : vector<1x2x32xf32> to vector<2x32xf32>
    %cst_239 = arith.constant dense<0.000000e+00> : vector<2x32xf32>
    %358 = tpu.matmul %350, %293, %cst_239 {dimension_numbers = #tpu.dot_dimension_numbers<[1], [0], [0], [1], [0, 0, 1, 1], [], []>} : vector<2x32xf32>, vector<32x32xf32>, vector<2x32xf32> -> vector<2x32xf32>
    %359 = arith.addf %357, %358 : vector<2x32xf32>
    %360 = math.tanh %359 : vector<2x32xf32>
    %361 = arith.index_cast %c6_i32_236 : i32 to index
    %c0_240 = arith.constant 0 : index
    %c0_241 = arith.constant 0 : index
    %362 = vector.load %arg8[%361, %c0_240, %c0_241] : memref<8x2x32xf32, #tpu.memory_space<vmem>>, vector<1x2x32xf32>
    %363 = vector.shape_cast %362 : vector<1x2x32xf32> to vector<2x32xf32>
    %364 = vector.shape_cast %360 : vector<2x32xf32> to vector<1x2x32xf32>
    tpu.vector_store %arg8[%361, %c0_240, %c0_241], %364 {strides = array<i32>} : memref<8x2x32xf32, #tpu.memory_space<vmem>>, vector<1x2x32xf32>,
    %c7_i32_242 = arith.constant 7 : i32
    %365 = arith.index_cast %c7_i32_242 : i32 to index
    %c0_243 = arith.constant 0 : index
    %c0_244 = arith.constant 0 : index
    %366 = vector.load %arg8[%365, %c0_243, %c0_244] : memref<8x2x32xf32, #tpu.memory_space<vmem>>, vector<1x2x32xf32>
    %367 = vector.shape_cast %366 : vector<1x2x32xf32> to vector<2x32xf32>
    %cst_245 = arith.constant dense<0.000000e+00> : vector<2x32xf32>
    %368 = tpu.matmul %360, %293, %cst_245 {dimension_numbers = #tpu.dot_dimension_numbers<[1], [0], [0], [1], [0, 0, 1, 1], [], []>} : vector<2x32xf32>, vector<32x32xf32>, vector<2x32xf32> -> vector<2x32xf32>
    %369 = arith.addf %367, %368 : vector<2x32xf32>
    %370 = math.tanh %369 : vector<2x32xf32>
    %371 = arith.index_cast %c7_i32_242 : i32 to index
    %c0_246 = arith.constant 0 : index
    %c0_247 = arith.constant 0 : index
    %372 = vector.load %arg8[%371, %c0_246, %c0_247] : memref<8x2x32xf32, #tpu.memory_space<vmem>>, vector<1x2x32xf32>
    %373 = vector.shape_cast %372 : vector<1x2x32xf32> to vector<2x32xf32>
    %374 = vector.shape_cast %370 : vector<2x32xf32> to vector<1x2x32xf32>
    tpu.vector_store %arg8[%371, %c0_246, %c0_247], %374 {strides = array<i32>} : memref<8x2x32xf32, #tpu.memory_space<vmem>>, vector<1x2x32xf32>,
    %c8_i32_248 = arith.constant 8 : i32
    %c0_249 = arith.constant 0 : index
    %c0_250 = arith.constant 0 : index
    %c0_251 = arith.constant 0 : index
    %375 = vector.load %arg8[%c0_249, %c0_250, %c0_251] : memref<8x2x32xf32, #tpu.memory_space<vmem>>, vector<8x2x32xf32>
    %376 = vector.shape_cast %375 : vector<8x2x32xf32> to vector<16x32xf32>
    %c3_252 = arith.constant 3 : index
    %c0_253 = arith.constant 0 : index
    %c0_254 = arith.constant 0 : index
    %377 = vector.load %arg2[%c3_252, %c0_253, %c0_254] : memref<4x32x32xf32, #tpu.memory_space<vmem>>, vector<1x32x32xf32>
    %378 = vector.shape_cast %377 : vector<1x32x32xf32> to vector<32x32xf32>
    %cst_255 = arith.constant dense<0.000000e+00> : vector<16x32xf32>
    %379 = tpu.matmul %376, %378, %cst_255 {dimension_numbers = #tpu.dot_dimension_numbers<[1], [0], [0], [1], [0, 0, 1, 1], [], []>} : vector<16x32xf32>, vector<32x32xf32>, vector<16x32xf32> -> vector<16x32xf32>
    %c4 = arith.constant 4 : index
    %c0_256 = arith.constant 0 : index
    %c0_257 = arith.constant 0 : index
    %380 = vector.load %arg4[%c4, %c0_256, %c0_257] : memref<5x1x32xf32, #tpu.memory_space<vmem>>, vector<1x1x32xf32>
    %381 = vector.shape_cast %380 : vector<1x1x32xf32> to vector<1x32xf32>
    %382 = vector.broadcast %381 : vector<1x32xf32> to vector<16x32xf32>
    %383 = arith.addf %379, %382 : vector<16x32xf32>
    %384 = vector.shape_cast %383 : vector<16x32xf32> to vector<8x2x32xf32>
    %c0_258 = arith.constant 0 : index
    %c0_259 = arith.constant 0 : index
    %c0_260 = arith.constant 0 : index
    %385 = vector.load %arg8[%c0_258, %c0_259, %c0_260] : memref<8x2x32xf32, #tpu.memory_space<vmem>>, vector<8x2x32xf32>
    tpu.vector_store %arg8[%c0_258, %c0_259, %c0_260], %384 {strides = array<i32>} : memref<8x2x32xf32, #tpu.memory_space<vmem>>, vector<8x2x32xf32>,
    %c4_261 = arith.constant 4 : index
    %c0_262 = arith.constant 0 : index
    %c0_263 = arith.constant 0 : index
    %386 = vector.load %arg3[%c4_261, %c0_262, %c0_263] : memref<5x32x32xf32, #tpu.memory_space<vmem>>, vector<1x32x32xf32>
    %387 = vector.shape_cast %386 : vector<1x32x32xf32> to vector<32x32xf32>
    %cst_264 = arith.constant 0.000000e+00 : f32
    %388 = vector.broadcast %cst_264 : f32 to vector<2x32xf32>
    %c0_i32_265 = arith.constant 0 : i32
    %389 = arith.index_cast %c0_i32_265 : i32 to index
    %c0_266 = arith.constant 0 : index
    %c0_267 = arith.constant 0 : index
    %390 = vector.load %arg8[%389, %c0_266, %c0_267] : memref<8x2x32xf32, #tpu.memory_space<vmem>>, vector<1x2x32xf32>
    %391 = vector.shape_cast %390 : vector<1x2x32xf32> to vector<2x32xf32>
    %cst_268 = arith.constant dense<0.000000e+00> : vector<2x32xf32>
    %392 = tpu.matmul %388, %387, %cst_268 {dimension_numbers = #tpu.dot_dimension_numbers<[1], [0], [0], [1], [0, 0, 1, 1], [], []>} : vector<2x32xf32>, vector<32x32xf32>, vector<2x32xf32> -> vector<2x32xf32>
    %393 = arith.addf %391, %392 : vector<2x32xf32>
    %394 = math.tanh %393 : vector<2x32xf32>
    %395 = arith.index_cast %c0_i32_265 : i32 to index
    %c0_269 = arith.constant 0 : index
    %c0_270 = arith.constant 0 : index
    %396 = vector.load %arg8[%395, %c0_269, %c0_270] : memref<8x2x32xf32, #tpu.memory_space<vmem>>, vector<1x2x32xf32>
    %397 = vector.shape_cast %396 : vector<1x2x32xf32> to vector<2x32xf32>
    %398 = vector.shape_cast %394 : vector<2x32xf32> to vector<1x2x32xf32>
    tpu.vector_store %arg8[%395, %c0_269, %c0_270], %398 {strides = array<i32>} : memref<8x2x32xf32, #tpu.memory_space<vmem>>, vector<1x2x32xf32>,
    %c1_i32_271 = arith.constant 1 : i32
    %399 = arith.index_cast %c1_i32_271 : i32 to index
    %c0_272 = arith.constant 0 : index
    %c0_273 = arith.constant 0 : index
    %400 = vector.load %arg8[%399, %c0_272, %c0_273] : memref<8x2x32xf32, #tpu.memory_space<vmem>>, vector<1x2x32xf32>
    %401 = vector.shape_cast %400 : vector<1x2x32xf32> to vector<2x32xf32>
    %cst_274 = arith.constant dense<0.000000e+00> : vector<2x32xf32>
    %402 = tpu.matmul %394, %387, %cst_274 {dimension_numbers = #tpu.dot_dimension_numbers<[1], [0], [0], [1], [0, 0, 1, 1], [], []>} : vector<2x32xf32>, vector<32x32xf32>, vector<2x32xf32> -> vector<2x32xf32>
    %403 = arith.addf %401, %402 : vector<2x32xf32>
    %404 = math.tanh %403 : vector<2x32xf32>
    %405 = arith.index_cast %c1_i32_271 : i32 to index
    %c0_275 = arith.constant 0 : index
    %c0_276 = arith.constant 0 : index
    %406 = vector.load %arg8[%405, %c0_275, %c0_276] : memref<8x2x32xf32, #tpu.memory_space<vmem>>, vector<1x2x32xf32>
    %407 = vector.shape_cast %406 : vector<1x2x32xf32> to vector<2x32xf32>
    %408 = vector.shape_cast %404 : vector<2x32xf32> to vector<1x2x32xf32>
    tpu.vector_store %arg8[%405, %c0_275, %c0_276], %408 {strides = array<i32>} : memref<8x2x32xf32, #tpu.memory_space<vmem>>, vector<1x2x32xf32>,
    %c2_i32_277 = arith.constant 2 : i32
    %409 = arith.index_cast %c2_i32_277 : i32 to index
    %c0_278 = arith.constant 0 : index
    %c0_279 = arith.constant 0 : index
    %410 = vector.load %arg8[%409, %c0_278, %c0_279] : memref<8x2x32xf32, #tpu.memory_space<vmem>>, vector<1x2x32xf32>
    %411 = vector.shape_cast %410 : vector<1x2x32xf32> to vector<2x32xf32>
    %cst_280 = arith.constant dense<0.000000e+00> : vector<2x32xf32>
    %412 = tpu.matmul %404, %387, %cst_280 {dimension_numbers = #tpu.dot_dimension_numbers<[1], [0], [0], [1], [0, 0, 1, 1], [], []>} : vector<2x32xf32>, vector<32x32xf32>, vector<2x32xf32> -> vector<2x32xf32>
    %413 = arith.addf %411, %412 : vector<2x32xf32>
    %414 = math.tanh %413 : vector<2x32xf32>
    %415 = arith.index_cast %c2_i32_277 : i32 to index
    %c0_281 = arith.constant 0 : index
    %c0_282 = arith.constant 0 : index
    %416 = vector.load %arg8[%415, %c0_281, %c0_282] : memref<8x2x32xf32, #tpu.memory_space<vmem>>, vector<1x2x32xf32>
    %417 = vector.shape_cast %416 : vector<1x2x32xf32> to vector<2x32xf32>
    %418 = vector.shape_cast %414 : vector<2x32xf32> to vector<1x2x32xf32>
    tpu.vector_store %arg8[%415, %c0_281, %c0_282], %418 {strides = array<i32>} : memref<8x2x32xf32, #tpu.memory_space<vmem>>, vector<1x2x32xf32>,
    %c3_i32_283 = arith.constant 3 : i32
    %419 = arith.index_cast %c3_i32_283 : i32 to index
    %c0_284 = arith.constant 0 : index
    %c0_285 = arith.constant 0 : index
    %420 = vector.load %arg8[%419, %c0_284, %c0_285] : memref<8x2x32xf32, #tpu.memory_space<vmem>>, vector<1x2x32xf32>
    %421 = vector.shape_cast %420 : vector<1x2x32xf32> to vector<2x32xf32>
    %cst_286 = arith.constant dense<0.000000e+00> : vector<2x32xf32>
    %422 = tpu.matmul %414, %387, %cst_286 {dimension_numbers = #tpu.dot_dimension_numbers<[1], [0], [0], [1], [0, 0, 1, 1], [], []>} : vector<2x32xf32>, vector<32x32xf32>, vector<2x32xf32> -> vector<2x32xf32>
    %423 = arith.addf %421, %422 : vector<2x32xf32>
    %424 = math.tanh %423 : vector<2x32xf32>
    %425 = arith.index_cast %c3_i32_283 : i32 to index
    %c0_287 = arith.constant 0 : index
    %c0_288 = arith.constant 0 : index
    %426 = vector.load %arg8[%425, %c0_287, %c0_288] : memref<8x2x32xf32, #tpu.memory_space<vmem>>, vector<1x2x32xf32>
    %427 = vector.shape_cast %426 : vector<1x2x32xf32> to vector<2x32xf32>
    %428 = vector.shape_cast %424 : vector<2x32xf32> to vector<1x2x32xf32>
    tpu.vector_store %arg8[%425, %c0_287, %c0_288], %428 {strides = array<i32>} : memref<8x2x32xf32, #tpu.memory_space<vmem>>, vector<1x2x32xf32>,
    %c4_i32_289 = arith.constant 4 : i32
    %429 = arith.index_cast %c4_i32_289 : i32 to index
    %c0_290 = arith.constant 0 : index
    %c0_291 = arith.constant 0 : index
    %430 = vector.load %arg8[%429, %c0_290, %c0_291] : memref<8x2x32xf32, #tpu.memory_space<vmem>>, vector<1x2x32xf32>
    %431 = vector.shape_cast %430 : vector<1x2x32xf32> to vector<2x32xf32>
    %cst_292 = arith.constant dense<0.000000e+00> : vector<2x32xf32>
    %432 = tpu.matmul %424, %387, %cst_292 {dimension_numbers = #tpu.dot_dimension_numbers<[1], [0], [0], [1], [0, 0, 1, 1], [], []>} : vector<2x32xf32>, vector<32x32xf32>, vector<2x32xf32> -> vector<2x32xf32>
    %433 = arith.addf %431, %432 : vector<2x32xf32>
    %434 = math.tanh %433 : vector<2x32xf32>
    %435 = arith.index_cast %c4_i32_289 : i32 to index
    %c0_293 = arith.constant 0 : index
    %c0_294 = arith.constant 0 : index
    %436 = vector.load %arg8[%435, %c0_293, %c0_294] : memref<8x2x32xf32, #tpu.memory_space<vmem>>, vector<1x2x32xf32>
    %437 = vector.shape_cast %436 : vector<1x2x32xf32> to vector<2x32xf32>
    %438 = vector.shape_cast %434 : vector<2x32xf32> to vector<1x2x32xf32>
    tpu.vector_store %arg8[%435, %c0_293, %c0_294], %438 {strides = array<i32>} : memref<8x2x32xf32, #tpu.memory_space<vmem>>, vector<1x2x32xf32>,
    %c5_i32_295 = arith.constant 5 : i32
    %439 = arith.index_cast %c5_i32_295 : i32 to index
    %c0_296 = arith.constant 0 : index
    %c0_297 = arith.constant 0 : index
    %440 = vector.load %arg8[%439, %c0_296, %c0_297] : memref<8x2x32xf32, #tpu.memory_space<vmem>>, vector<1x2x32xf32>
    %441 = vector.shape_cast %440 : vector<1x2x32xf32> to vector<2x32xf32>
    %cst_298 = arith.constant dense<0.000000e+00> : vector<2x32xf32>
    %442 = tpu.matmul %434, %387, %cst_298 {dimension_numbers = #tpu.dot_dimension_numbers<[1], [0], [0], [1], [0, 0, 1, 1], [], []>} : vector<2x32xf32>, vector<32x32xf32>, vector<2x32xf32> -> vector<2x32xf32>
    %443 = arith.addf %441, %442 : vector<2x32xf32>
    %444 = math.tanh %443 : vector<2x32xf32>
    %445 = arith.index_cast %c5_i32_295 : i32 to index
    %c0_299 = arith.constant 0 : index
    %c0_300 = arith.constant 0 : index
    %446 = vector.load %arg8[%445, %c0_299, %c0_300] : memref<8x2x32xf32, #tpu.memory_space<vmem>>, vector<1x2x32xf32>
    %447 = vector.shape_cast %446 : vector<1x2x32xf32> to vector<2x32xf32>
    %448 = vector.shape_cast %444 : vector<2x32xf32> to vector<1x2x32xf32>
    tpu.vector_store %arg8[%445, %c0_299, %c0_300], %448 {strides = array<i32>} : memref<8x2x32xf32, #tpu.memory_space<vmem>>, vector<1x2x32xf32>,
    %c6_i32_301 = arith.constant 6 : i32
    %449 = arith.index_cast %c6_i32_301 : i32 to index
    %c0_302 = arith.constant 0 : index
    %c0_303 = arith.constant 0 : index
    %450 = vector.load %arg8[%449, %c0_302, %c0_303] : memref<8x2x32xf32, #tpu.memory_space<vmem>>, vector<1x2x32xf32>
    %451 = vector.shape_cast %450 : vector<1x2x32xf32> to vector<2x32xf32>
    %cst_304 = arith.constant dense<0.000000e+00> : vector<2x32xf32>
    %452 = tpu.matmul %444, %387, %cst_304 {dimension_numbers = #tpu.dot_dimension_numbers<[1], [0], [0], [1], [0, 0, 1, 1], [], []>} : vector<2x32xf32>, vector<32x32xf32>, vector<2x32xf32> -> vector<2x32xf32>
    %453 = arith.addf %451, %452 : vector<2x32xf32>
    %454 = math.tanh %453 : vector<2x32xf32>
    %455 = arith.index_cast %c6_i32_301 : i32 to index
    %c0_305 = arith.constant 0 : index
    %c0_306 = arith.constant 0 : index
    %456 = vector.load %arg8[%455, %c0_305, %c0_306] : memref<8x2x32xf32, #tpu.memory_space<vmem>>, vector<1x2x32xf32>
    %457 = vector.shape_cast %456 : vector<1x2x32xf32> to vector<2x32xf32>
    %458 = vector.shape_cast %454 : vector<2x32xf32> to vector<1x2x32xf32>
    tpu.vector_store %arg8[%455, %c0_305, %c0_306], %458 {strides = array<i32>} : memref<8x2x32xf32, #tpu.memory_space<vmem>>, vector<1x2x32xf32>,
    %c7_i32_307 = arith.constant 7 : i32
    %459 = arith.index_cast %c7_i32_307 : i32 to index
    %c0_308 = arith.constant 0 : index
    %c0_309 = arith.constant 0 : index
    %460 = vector.load %arg8[%459, %c0_308, %c0_309] : memref<8x2x32xf32, #tpu.memory_space<vmem>>, vector<1x2x32xf32>
    %461 = vector.shape_cast %460 : vector<1x2x32xf32> to vector<2x32xf32>
    %cst_310 = arith.constant dense<0.000000e+00> : vector<2x32xf32>
    %462 = tpu.matmul %454, %387, %cst_310 {dimension_numbers = #tpu.dot_dimension_numbers<[1], [0], [0], [1], [0, 0, 1, 1], [], []>} : vector<2x32xf32>, vector<32x32xf32>, vector<2x32xf32> -> vector<2x32xf32>
    %463 = arith.addf %461, %462 : vector<2x32xf32>
    %464 = math.tanh %463 : vector<2x32xf32>
    %465 = arith.index_cast %c7_i32_307 : i32 to index
    %c0_311 = arith.constant 0 : index
    %c0_312 = arith.constant 0 : index
    %466 = vector.load %arg8[%465, %c0_311, %c0_312] : memref<8x2x32xf32, #tpu.memory_space<vmem>>, vector<1x2x32xf32>
    %467 = vector.shape_cast %466 : vector<1x2x32xf32> to vector<2x32xf32>
    %468 = vector.shape_cast %464 : vector<2x32xf32> to vector<1x2x32xf32>
    tpu.vector_store %arg8[%465, %c0_311, %c0_312], %468 {strides = array<i32>} : memref<8x2x32xf32, #tpu.memory_space<vmem>>, vector<1x2x32xf32>,
    %c8_i32_313 = arith.constant 8 : i32
    %c0_314 = arith.constant 0 : index
    %c0_315 = arith.constant 0 : index
    %c0_316 = arith.constant 0 : index
    %469 = vector.load %arg8[%c0_314, %c0_315, %c0_316] : memref<8x2x32xf32, #tpu.memory_space<vmem>>, vector<8x2x32xf32>
    %470 = vector.shape_cast %469 : vector<8x2x32xf32> to vector<16x32xf32>
    %c0_317 = arith.constant 0 : index
    %c0_318 = arith.constant 0 : index
    %471 = vector.load %arg5[%c0_317, %c0_318] : memref<32x1xf32, #tpu.memory_space<vmem>>, vector<32x1xf32>
    %cst_319 = arith.constant dense<0.000000e+00> : vector<16x1xf32>
    %472 = tpu.matmul %470, %471, %cst_319 {dimension_numbers = #tpu.dot_dimension_numbers<[1], [0], [0], [1], [0, 0, 1, 1], [], []>} : vector<16x32xf32>, vector<32x1xf32>, vector<16x1xf32> -> vector<16x1xf32>
    %c0_320 = arith.constant 0 : index
    %c0_321 = arith.constant 0 : index
    %473 = vector.load %arg6[%c0_320, %c0_321] : memref<1x1xf32, #tpu.memory_space<vmem>>, vector<1x1xf32>
    %474 = vector.broadcast %473 : vector<1x1xf32> to vector<16x1xf32>
    %475 = arith.addf %472, %474 : vector<16x1xf32>
    %476 = vector.shape_cast %475 : vector<16x1xf32> to vector<8x2x1xf32>
    %c0_322 = arith.constant 0 : index
    %c0_323 = arith.constant 0 : index
    %c0_324 = arith.constant 0 : index
    %477 = vector.load %arg7[%c0_322, %c0_323, %c0_324] : memref<8x2x1xf32, #tpu.memory_space<vmem>>, vector<8x2x1xf32>
    tpu.vector_store %arg7[%c0_322, %c0_323, %c0_324], %476 {strides = array<i32>} : memref<8x2x1xf32, #tpu.memory_space<vmem>>, vector<8x2x1xf32>,
    return
  }
}

</mosaic_0001>

<llo_original>
// kernel: tpu_custom_call.1
$region0: #{tpu_custom_call.1}
  #allocation0 [shape = 'u32[]', space=smem, size = 0x4, offset = 0x4, fixed_abs, tag = 'smem constant byte address 0x4 - core index']
  #allocation1 [shape = 'u32[72,128]{1,0:T(1,128)}', space=vmem, size = 0x9000, scoped, tag = 'internal scratch']
  #allocation2 [shape = 'f32[8,2,32]{2,1,0:T(2,128)}', space=vmem, size = 0x2000, scoped, tag = 'scratch operand']
  #allocation3 [shape = 'f32[1,1]{1,0:T(1,128)S(1)}', space=vmem, size = 0x200, scoped, tag = 'scoped memory for tpu_custom_call.1']
  %s0 = inlined_call_operand.vmem [shape: f32[8,2,4], index: 0, kind: input, shape index: {}]
  %s1 = inlined_call_operand.vmem [shape: f32[4,32], index: 1, kind: input, shape index: {}]
  %s2 = inlined_call_operand.hbm [shape: f32[4,32,32], index: 2, kind: input, shape index: {}]
  %s3 = inlined_call_operand.hbm [shape: f32[5,32,32], index: 3, kind: input, shape index: {}]
  %s4 = inlined_call_operand.vmem [shape: f32[5,1,32], index: 4, kind: input, shape index: {}]
  %s5 = inlined_call_operand.vmem [shape: f32[32,1], index: 5, kind: input, shape index: {}]
  %s6 = inlined_call_operand.<no memory space> [shape: f32[1,1], index: 6, kind: input, shape index: {}]
  %s7 = inlined_call_operand.vmem [shape: f32[8,2,1], index: 7, kind: output, shape index: {}]
  %s8 = sld [smem:[#allocation0]]
  $region46: #{tpu_custom_call.1} parent=0
    _
  %s10 = ssub.s32 1, %s8
  %s11 = scalar_select 0, %s10, %s8
  %v12 = vstv %s6
  %13 = vst [vmem:[#allocation3] sm:$0x1] %v12
  $region1: #{tpu_custom_call.1} parent=0
    #allocation4 [shape = 'u8[65536]{0}', space=vmem, size = 0x10000, scoped, tag = 'input window, operand 2, single buffered']
    #allocation5 [shape = 's32[1]{0}', space=sflag, size = 0x4, scoped, tag = 'scoped memory for tpu_custom_call.1']
    #allocation6 [shape = 'u8[81920]{0}', space=vmem, size = 0x14000, scoped, tag = 'input window, operand 3, single buffered']
    #allocation7 [shape = 's32[1]{0}', space=sflag, size = 0x4, scoped, tag = 'scoped memory for tpu_custom_call.1']
    %14 = vsyncpa [#allocation5], 0
    %15 = vsyncpa [#allocation7], 0
    // Predicated region
    $region2: #{tpu_custom_call.1} parent=1 // pred_check
      _
    $region3: #{tpu_custom_call.1} parent=1 // pred_check_branch
      %17 = sbr.rel (0) target = $region5
    $region4: #{tpu_custom_call.1} parent=1 // pred_region
      _
    $region5: #{tpu_custom_call.1} parent=1 // pred_fallthru
      _
    // Predicated region
    $region6: #{tpu_custom_call.1} parent=1 // pred_check
      _
    $region7: #{tpu_custom_call.1} parent=1 // pred_check_branch
      %19 = sbr.rel (0) target = $region9
    $region8: #{tpu_custom_call.1} parent=1 // pred_region
      _
    $region9: #{tpu_custom_call.1} parent=1 // pred_fallthru
      _
    // Predicated region
    $region10: #{tpu_custom_call.1} parent=1 // pred_check
      _
    $region11: #{tpu_custom_call.1} parent=1 // pred_check_branch
      %21 = sbr.rel (0) target = $region13
    $region12: #{tpu_custom_call.1} parent=1 // pred_region
      %23 = vsyncadd [#allocation5], 0
      %s24 = sshll.u32 %s2, 4
      %s25 = int_to_ptr.hbm [resolvable:$true] %s24
      %s26 = sshll.u32 [#allocation4], 4
      %s27 = int_to_ptr.vmem [resolvable:$true] %s26
      %32 = dma.hbm_to_vmem [thread:$0]  %s25, 2048, %s27, [#allocation5], 128, 128, 8
    $region13: #{tpu_custom_call.1} parent=1 // pred_fallthru
      _
    // Predicated region
    $region14: #{tpu_custom_call.1} parent=1 // pred_check
      _
    $region15: #{tpu_custom_call.1} parent=1 // pred_check_branch
      %34 = sbr.rel (0) target = $region17
    $region16: #{tpu_custom_call.1} parent=1 // pred_region
      %36 = vsyncadd [#allocation7], 0
      %s37 = sshll.u32 %s3, 4
      %s38 = int_to_ptr.hbm [resolvable:$true] %s37
      %s39 = sshll.u32 [#allocation6], 4
      %s40 = int_to_ptr.vmem [resolvable:$true] %s39
      %45 = dma.hbm_to_vmem [thread:$0]  %s38, 2560, %s40, [#allocation7], 128, 128, 8
    $region17: #{tpu_custom_call.1} parent=1 // pred_fallthru
      _
    // Predicated region
    $region18: #{tpu_custom_call.1} parent=1 // pred_check
      _
    $region19: #{tpu_custom_call.1} parent=1 // pred_check_branch
      %47 = sbr.rel (0) target = $region21
    $region20: #{tpu_custom_call.1} parent=1 // pred_region
      _
    $region21: #{tpu_custom_call.1} parent=1 // pred_fallthru
      _
    // Predicated region
    $region22: #{tpu_custom_call.1} parent=1 // pred_check
      _
    $region23: #{tpu_custom_call.1} parent=1 // pred_check_branch
      %49 = sbr.rel (0) target = $region25
    $region24: #{tpu_custom_call.1} parent=1 // pred_region
      _
    $region25: #{tpu_custom_call.1} parent=1 // pred_fallthru
      _
    // Predicated region
    $region26: #{tpu_custom_call.1} parent=1 // pred_check
      _
    $region27: #{tpu_custom_call.1} parent=1 // pred_check_branch
      %51 = sbr.rel (0) target = $region29
    $region28: #{tpu_custom_call.1} parent=1 // pred_region
      _
    $region29: #{tpu_custom_call.1} parent=1 // pred_fallthru
      _
    // Predicated region
    $region30: #{tpu_custom_call.1} parent=1 // pred_check
      _
    $region31: #{tpu_custom_call.1} parent=1 // pred_check_branch
      %53 = sbr.rel (0) target = $region33
    $region32: #{tpu_custom_call.1} parent=1 // pred_region
      %55 = dma.done [#allocation5], 2048
    $region33: #{tpu_custom_call.1} parent=1 // pred_fallthru
      _
    // Predicated region
    $region34: #{tpu_custom_call.1} parent=1 // pred_check
      _
    $region35: #{tpu_custom_call.1} parent=1 // pred_check_branch
      %57 = sbr.rel (0) target = $region37
    $region36: #{tpu_custom_call.1} parent=1 // pred_region
      %59 = dma.done [#allocation7], 2560
    $region37: #{tpu_custom_call.1} parent=1 // pred_fallthru
      _
    %v60 = vld [vmem:[%s0] sm:$0x3]
    %v61 = vld [vmem:[%s0 + $0x2] sm:$0x3]
    %v62 = vld [vmem:[%s0 + $0x4] sm:$0x3]
    %v63 = vld [vmem:[%s0 + $0x6] sm:$0x3]
    %v64 = vld [vmem:[%s0 + $0x8] sm:$0x3]
    %v65 = vld [vmem:[%s0 + $0xa] sm:$0x3]
    %v66 = vld [vmem:[%s0 + $0xc] sm:$0x3]
    %v67 = vld [vmem:[%s0 + $0xe] sm:$0x3]
    %v68 = vld [vmem:[%s1] sm:$0xf]
    %v69 = vld [vmem:[%s4] sm:$0x1]
    %v71 = vperm.slane %v69, 0
    %81 = vst [vmem:[#allocation1] ss:$4 sm:$0xff] %v60
    %s82 = scalar_lea.vmem [#allocation1], 1
    %83 = vst [vmem:[%s82] ss:$4 sm:$0xff] %v61
    %s84 = scalar_lea.vmem [#allocation1], 2
    %85 = vst [vmem:[%s84] ss:$4 sm:$0xff] %v62
    %s86 = scalar_lea.vmem [#allocation1], 3
    %87 = vst [vmem:[%s86] ss:$4 sm:$0xff] %v63
    %s88 = scalar_lea.vmem [#allocation1], 32
    %89 = vst [vmem:[%s88] ss:$4 sm:$0xff] %v64
    %s90 = scalar_lea.vmem [#allocation1], 33
    %91 = vst [vmem:[%s90] ss:$4 sm:$0xff] %v65
    %s92 = scalar_lea.vmem [#allocation1], 34
    %93 = vst [vmem:[%s92] ss:$4 sm:$0xff] %v66
    %s94 = scalar_lea.vmem [#allocation1], 35
    %95 = vst [vmem:[%s94] ss:$4 sm:$0xff] %v67
    %v96 = vld.sshfl [vmem:[#allocation1] sm:$0xff pattern:$0x73625140]
    %v97 = vld.sshfl [vmem:[#allocation1 + $0x20] sm:$0xff pattern:$0x73625140]
    %vm98 = vcmask 31744
    %v99 = vsel %vm98, %v96, 0
    %v101 = vsel %vm98, %v97, 0
    %vm103 = vcmask 1043456
    %v105 = vsel %vm103, %v68, 0
    %107 = vmatpush.msra.mxu0 0.0
    %108 = vmatpush.msra.mxu0 0.0
    %109 = vmatpush.msra.mxu0 0.0
    %110 = vmatpush.msra.mxu0 0.0
    %111 = vmatpush.msra.mxu0 0.0
    %112 = vmatpush.msra.mxu0 0.0
    %113 = vmatpush.msra.mxu0 0.0
    %114 = vmatpush.msra.mxu0 0.0
    %115 = vmatpush.msra.mxu0 0.0
    %116 = vmatpush.msra.mxu0 0.0
    %117 = vmatpush.msra.mxu0 0.0
    %118 = vmatpush.msra.mxu0 0.0
    %119 = vmatpush.msra.mxu0 0.0
    %120 = vmatpush.msra.mxu0 0.0
    %121 = vmatpush.msra.mxu0 0.0
    %122 = vmatpush.msra.mxu0 %v105
    %123 = vmatmul.f32.gmra.mxu0 %v99
    %v124 = vpop.f32.mrf.mxu0
    %v125 = vadd.f32 %v71, %v124
    %126 = vmatmul.f32.gmra.mxu0 %v101
    %v127 = vpop.f32.mrf.mxu0
    %v128 = vadd.f32 %v71, %v127
    %129 = vdwg.mxu0
    %v132 = vrot.slane %v125, 2
    %v133 = vrot.slane %v125, 4
    %v134 = vrot.slane %v125, 6
    %v135 = vrot.slane %v128, 2
    %v136 = vrot.slane %v128, 4
    %v137 = vrot.slane %v128, 6
    %vm144 = vcmask 254976
    %145 = vst.msk [vmem:[#allocation2] sm:$0x3] %vm144, %v125
    %146 = vst.msk [vmem:[#allocation2 + $0x2] sm:$0x3] %vm144, %v132
    %147 = vst.msk [vmem:[#allocation2 + $0x4] sm:$0x3] %vm144, %v133
    %148 = vst.msk [vmem:[#allocation2 + $0x6] sm:$0x3] %vm144, %v134
    %149 = vst.msk [vmem:[#allocation2 + $0x8] sm:$0x3] %vm144, %v128
    %150 = vst.msk [vmem:[#allocation2 + $0xa] sm:$0x3] %vm144, %v135
    %151 = vst.msk [vmem:[#allocation2 + $0xc] sm:$0x3] %vm144, %v136
    %152 = vst.msk [vmem:[#allocation2 + $0xe] sm:$0x3] %vm144, %v137
    %v153 = vld [vmem:[#allocation6] sm:$0xff]
    %v154 = vld [vmem:[#allocation6 + $0x8] sm:$0xff]
    %v155 = vld [vmem:[#allocation6 + $0x10] sm:$0xff]
    %v156 = vld [vmem:[#allocation6 + $0x18] sm:$0xff]
    %v157 = vld [vmem:[#allocation2] sm:$0x3]
    %vm158 = vcmask 261120
    %v160 = vsel %vm158, 0.0, 0
    %162 = vmatpush.msra.mxu0 0.0
    %163 = vmatpush.msra.mxu0 0.0
    %164 = vmatpush.msra.mxu0 0.0
    %165 = vmatpush.msra.mxu0 0.0
    %166 = vmatpush.msra.mxu0 0.0
    %167 = vmatpush.msra.mxu0 0.0
    %168 = vmatpush.msra.mxu0 0.0
    %169 = vmatpush.msra.mxu0 0.0
    %170 = vmatpush.msra.mxu0 0.0
    %171 = vmatpush.msra.mxu0 0.0
    %172 = vmatpush.msra.mxu0 0.0
    %173 = vmatpush.msra.mxu0 0.0
    %174 = vmatpush.msra.mxu0 %v156
    %175 = vmatpush.msra.mxu0 %v155
    %176 = vmatpush.msra.mxu0 %v154
    %177 = vmatpush.msra.mxu0 %v153
    %178 = vmatmul.f32.gmra.mxu0 %v160
    %v179 = vpop.f32.mrf.mxu0
    %v180 = vadd.f32 0.0, %v179
    %181 = vdwg.mxu0
    %v182 = vadd.f32 %v157, %v180
    %v183 = vtanh.pop %v182
    %184 = vst.msk [vmem:[#allocation2] sm:$0x3] %vm144, %v183
    %s185 = scalar_lea.vmem [#allocation2], 2
    %v186 = vld [vmem:[%s185] sm:$0x3]
    %v188 = vsel %vm158, %v183, 0
    %190 = vmatpush.msra.mxu0 0.0
    %191 = vmatpush.msra.mxu0 0.0
    %192 = vmatpush.msra.mxu0 0.0
    %193 = vmatpush.msra.mxu0 0.0
    %194 = vmatpush.msra.mxu0 0.0
    %195 = vmatpush.msra.mxu0 0.0
    %196 = vmatpush.msra.mxu0 0.0
    %197 = vmatpush.msra.mxu0 0.0
    %198 = vmatpush.msra.mxu0 0.0
    %199 = vmatpush.msra.mxu0 0.0
    %200 = vmatpush.msra.mxu0 0.0
    %201 = vmatpush.msra.mxu0 0.0
    %202 = vmatpush.msra.mxu0 %v156
    %203 = vmatpush.msra.mxu0 %v155
    %204 = vmatpush.msra.mxu0 %v154
    %205 = vmatpush.msra.mxu0 %v153
    %206 = vmatmul.f32.gmra.mxu0 %v188
    %v207 = vpop.f32.mrf.mxu0
    %v208 = vadd.f32 0.0, %v207
    %209 = vdwg.mxu0
    %v210 = vadd.f32 %v186, %v208
    %v211 = vtanh.pop %v210
    %212 = vst.msk [vmem:[%s185] sm:$0x3] %vm144, %v211
    %s213 = scalar_lea.vmem [#allocation2], 4
    %v214 = vld [vmem:[%s213] sm:$0x3]
    %v216 = vsel %vm158, %v211, 0
    %218 = vmatpush.msra.mxu0 0.0
    %219 = vmatpush.msra.mxu0 0.0
    %220 = vmatpush.msra.mxu0 0.0
    %221 = vmatpush.msra.mxu0 0.0
    %222 = vmatpush.msra.mxu0 0.0
    %223 = vmatpush.msra.mxu0 0.0
    %224 = vmatpush.msra.mxu0 0.0
    %225 = vmatpush.msra.mxu0 0.0
    %226 = vmatpush.msra.mxu0 0.0
    %227 = vmatpush.msra.mxu0 0.0
    %228 = vmatpush.msra.mxu0 0.0
    %229 = vmatpush.msra.mxu0 0.0
    %230 = vmatpush.msra.mxu0 %v156
    %231 = vmatpush.msra.mxu0 %v155
    %232 = vmatpush.msra.mxu0 %v154
    %233 = vmatpush.msra.mxu0 %v153
    %234 = vmatmul.f32.gmra.mxu0 %v216
    %v235 = vpop.f32.mrf.mxu0
    %v236 = vadd.f32 0.0, %v235
    %237 = vdwg.mxu0
    %v238 = vadd.f32 %v214, %v236
    %v239 = vtanh.pop %v238
    %240 = vst.msk [vmem:[%s213] sm:$0x3] %vm144, %v239
    %s241 = scalar_lea.vmem [#allocation2], 6
    %v242 = vld [vmem:[%s241] sm:$0x3]
    %v244 = vsel %vm158, %v239, 0
    %246 = vmatpush.msra.mxu0 0.0
    %247 = vmatpush.msra.mxu0 0.0
    %248 = vmatpush.msra.mxu0 0.0
    %249 = vmatpush.msra.mxu0 0.0
    %250 = vmatpush.msra.mxu0 0.0
    %251 = vmatpush.msra.mxu0 0.0
    %252 = vmatpush.msra.mxu0 0.0
    %253 = vmatpush.msra.mxu0 0.0
    %254 = vmatpush.msra.mxu0 0.0
    %255 = vmatpush.msra.mxu0 0.0
    %256 = vmatpush.msra.mxu0 0.0
    %257 = vmatpush.msra.mxu0 0.0
    %258 = vmatpush.msra.mxu0 %v156
    %259 = vmatpush.msra.mxu0 %v155
    %260 = vmatpush.msra.mxu0 %v154
    %261 = vmatpush.msra.mxu0 %v153
    %262 = vmatmul.f32.gmra.mxu0 %v244
    %v263 = vpop.f32.mrf.mxu0
    %v264 = vadd.f32 0.0, %v263
    %265 = vdwg.mxu0
    %v266 = vadd.f32 %v242, %v264
    %v267 = vtanh.pop %v266
    %268 = vst.msk [vmem:[%s241] sm:$0x3] %vm144, %v267
    %s269 = scalar_lea.vmem [#allocation2], 8
    %v270 = vld [vmem:[%s269] sm:$0x3]
    %v272 = vsel %vm158, %v267, 0
    %274 = vmatpush.msra.mxu0 0.0
    %275 = vmatpush.msra.mxu0 0.0
    %276 = vmatpush.msra.mxu0 0.0
    %277 = vmatpush.msra.mxu0 0.0
    %278 = vmatpush.msra.mxu0 0.0
    %279 = vmatpush.msra.mxu0 0.0
    %280 = vmatpush.msra.mxu0 0.0
    %281 = vmatpush.msra.mxu0 0.0
    %282 = vmatpush.msra.mxu0 0.0
    %283 = vmatpush.msra.mxu0 0.0
    %284 = vmatpush.msra.mxu0 0.0
    %285 = vmatpush.msra.mxu0 0.0
    %286 = vmatpush.msra.mxu0 %v156
    %287 = vmatpush.msra.mxu0 %v155
    %288 = vmatpush.msra.mxu0 %v154
    %289 = vmatpush.msra.mxu0 %v153
    %290 = vmatmul.f32.gmra.mxu0 %v272
    %v291 = vpop.f32.mrf.mxu0
    %v292 = vadd.f32 0.0, %v291
    %293 = vdwg.mxu0
    %v294 = vadd.f32 %v270, %v292
    %v295 = vtanh.pop %v294
    %296 = vst.msk [vmem:[%s269] sm:$0x3] %vm144, %v295
    %s297 = scalar_lea.vmem [#allocation2], 10
    %v298 = vld [vmem:[%s297] sm:$0x3]
    %v300 = vsel %vm158, %v295, 0
    %302 = vmatpush.msra.mxu0 0.0
    %303 = vmatpush.msra.mxu0 0.0
    %304 = vmatpush.msra.mxu0 0.0
    %305 = vmatpush.msra.mxu0 0.0
    %306 = vmatpush.msra.mxu0 0.0
    %307 = vmatpush.msra.mxu0 0.0
    %308 = vmatpush.msra.mxu0 0.0
    %309 = vmatpush.msra.mxu0 0.0
    %310 = vmatpush.msra.mxu0 0.0
    %311 = vmatpush.msra.mxu0 0.0
    %312 = vmatpush.msra.mxu0 0.0
    %313 = vmatpush.msra.mxu0 0.0
    %314 = vmatpush.msra.mxu0 %v156
    %315 = vmatpush.msra.mxu0 %v155
    %316 = vmatpush.msra.mxu0 %v154
    %317 = vmatpush.msra.mxu0 %v153
    %318 = vmatmul.f32.gmra.mxu0 %v300
    %v319 = vpop.f32.mrf.mxu0
    %v320 = vadd.f32 0.0, %v319
    %321 = vdwg.mxu0
    %v322 = vadd.f32 %v298, %v320
    %v323 = vtanh.pop %v322
    %324 = vst.msk [vmem:[%s297] sm:$0x3] %vm144, %v323
    %s325 = scalar_lea.vmem [#allocation2], 12
    %v326 = vld [vmem:[%s325] sm:$0x3]
    %v328 = vsel %vm158, %v323, 0
    %330 = vmatpush.msra.mxu0 0.0
    %331 = vmatpush.msra.mxu0 0.0
    %332 = vmatpush.msra.mxu0 0.0
    %333 = vmatpush.msra.mxu0 0.0
    %334 = vmatpush.msra.mxu0 0.0
    %335 = vmatpush.msra.mxu0 0.0
    %336 = vmatpush.msra.mxu0 0.0
    %337 = vmatpush.msra.mxu0 0.0
    %338 = vmatpush.msra.mxu0 0.0
    %339 = vmatpush.msra.mxu0 0.0
    %340 = vmatpush.msra.mxu0 0.0
    %341 = vmatpush.msra.mxu0 0.0
    %342 = vmatpush.msra.mxu0 %v156
    %343 = vmatpush.msra.mxu0 %v155
    %344 = vmatpush.msra.mxu0 %v154
    %345 = vmatpush.msra.mxu0 %v153
    %346 = vmatmul.f32.gmra.mxu0 %v328
    %v347 = vpop.f32.mrf.mxu0
    %v348 = vadd.f32 0.0, %v347
    %349 = vdwg.mxu0
    %v350 = vadd.f32 %v326, %v348
    %v351 = vtanh.pop %v350
    %352 = vst.msk [vmem:[%s325] sm:$0x3] %vm144, %v351
    %s353 = scalar_lea.vmem [#allocation2], 14
    %v354 = vld [vmem:[%s353] sm:$0x3]
    %v356 = vsel %vm158, %v351, 0
    %358 = vmatpush.msra.mxu0 0.0
    %359 = vmatpush.msra.mxu0 0.0
    %360 = vmatpush.msra.mxu0 0.0
    %361 = vmatpush.msra.mxu0 0.0
    %362 = vmatpush.msra.mxu0 0.0
    %363 = vmatpush.msra.mxu0 0.0
    %364 = vmatpush.msra.mxu0 0.0
    %365 = vmatpush.msra.mxu0 0.0
    %366 = vmatpush.msra.mxu0 0.0
    %367 = vmatpush.msra.mxu0 0.0
    %368 = vmatpush.msra.mxu0 0.0
    %369 = vmatpush.msra.mxu0 0.0
    %370 = vmatpush.msra.mxu0 %v156
    %371 = vmatpush.msra.mxu0 %v155
    %372 = vmatpush.msra.mxu0 %v154
    %373 = vmatpush.msra.mxu0 %v153
    %374 = vmatmul.f32.gmra.mxu0 %v356
    %v375 = vpop.f32.mrf.mxu0
    %v376 = vadd.f32 0.0, %v375
    %377 = vdwg.mxu0
    %v378 = vadd.f32 %v354, %v376
    %v379 = vtanh.pop %v378
    %380 = vst.msk [vmem:[%s353] sm:$0x3] %vm144, %v379
    %v381 = vld [vmem:[#allocation2] sm:$0x3]
    %v382 = vld [vmem:[#allocation2 + $0x2] sm:$0x3]
    %v383 = vld [vmem:[#allocation2 + $0x4] sm:$0x3]
    %v384 = vld [vmem:[#allocation2 + $0x6] sm:$0x3]
    %v385 = vld [vmem:[#allocation2 + $0x8] sm:$0x3]
    %v386 = vld [vmem:[#allocation2 + $0xa] sm:$0x3]
    %v387 = vld [vmem:[#allocation2 + $0xc] sm:$0x3]
    %v388 = vld [vmem:[#allocation2 + $0xe] sm:$0x3]
    %v389 = vld [vmem:[#allocation4] sm:$0xff]
    %v390 = vld [vmem:[#allocation4 + $0x8] sm:$0xff]
    %v391 = vld [vmem:[#allocation4 + $0x10] sm:$0xff]
    %v392 = vld [vmem:[#allocation4 + $0x18] sm:$0xff]
    %s393 = scalar_lea.vmem %s4, 1
    %v394 = vld [vmem:[%s393] sm:$0x1]
    %v396 = vperm.slane %v394, 0
    %406 = vst [vmem:[#allocation1] ss:$4 sm:$0xff] %v381
    %s407 = scalar_lea.vmem [#allocation1], 1
    %408 = vst [vmem:[%s407] ss:$4 sm:$0xff] %v382
    %s409 = scalar_lea.vmem [#allocation1], 2
    %410 = vst [vmem:[%s409] ss:$4 sm:$0xff] %v383
    %s411 = scalar_lea.vmem [#allocation1], 3
    %412 = vst [vmem:[%s411] ss:$4 sm:$0xff] %v384
    %s413 = scalar_lea.vmem [#allocation1], 32
    %414 = vst [vmem:[%s413] ss:$4 sm:$0xff] %v385
    %s415 = scalar_lea.vmem [#allocation1], 33
    %416 = vst [vmem:[%s415] ss:$4 sm:$0xff] %v386
    %s417 = scalar_lea.vmem [#allocation1], 34
    %418 = vst [vmem:[%s417] ss:$4 sm:$0xff] %v387
    %s419 = scalar_lea.vmem [#allocation1], 35
    %420 = vst [vmem:[%s419] ss:$4 sm:$0xff] %v388
    %v421 = vld.sshfl [vmem:[#allocation1] sm:$0xff pattern:$0x73625140]
    %v422 = vld.sshfl [vmem:[#allocation1 + $0x20] sm:$0xff pattern:$0x73625140]
    %v423 = vsel %vm158, %v421, 0
    %v425 = vsel %vm158, %v422, 0
    %427 = vmatpush.msra.mxu0 0.0
    %428 = vmatpush.msra.mxu0 0.0
    %429 = vmatpush.msra.mxu0 0.0
    %430 = vmatpush.msra.mxu0 0.0
    %431 = vmatpush.msra.mxu0 0.0
    %432 = vmatpush.msra.mxu0 0.0
    %433 = vmatpush.msra.mxu0 0.0
    %434 = vmatpush.msra.mxu0 0.0
    %435 = vmatpush.msra.mxu0 0.0
    %436 = vmatpush.msra.mxu0 0.0
    %437 = vmatpush.msra.mxu0 0.0
    %438 = vmatpush.msra.mxu0 0.0
    %439 = vmatpush.msra.mxu0 %v392
    %440 = vmatpush.msra.mxu0 %v391
    %441 = vmatpush.msra.mxu0 %v390
    %442 = vmatpush.msra.mxu0 %v389
    %443 = vmatmul.f32.gmra.mxu0 %v423
    %v444 = vpop.f32.mrf.mxu0
    %v445 = vadd.f32 %v396, %v444
    %446 = vmatmul.f32.gmra.mxu0 %v425
    %v447 = vpop.f32.mrf.mxu0
    %v448 = vadd.f32 %v396, %v447
    %449 = vdwg.mxu0
    %v452 = vrot.slane %v445, 2
    %v453 = vrot.slane %v445, 4
    %v454 = vrot.slane %v445, 6
    %v455 = vrot.slane %v448, 2
    %v456 = vrot.slane %v448, 4
    %v457 = vrot.slane %v448, 6
    %464 = vst.msk [vmem:[#allocation2] sm:$0x3] %vm144, %v445
    %465 = vst.msk [vmem:[#allocation2 + $0x2] sm:$0x3] %vm144, %v452
    %466 = vst.msk [vmem:[#allocation2 + $0x4] sm:$0x3] %vm144, %v453
    %467 = vst.msk [vmem:[#allocation2 + $0x6] sm:$0x3] %vm144, %v454
    %468 = vst.msk [vmem:[#allocation2 + $0x8] sm:$0x3] %vm144, %v448
    %469 = vst.msk [vmem:[#allocation2 + $0xa] sm:$0x3] %vm144, %v455
    %470 = vst.msk [vmem:[#allocation2 + $0xc] sm:$0x3] %vm144, %v456
    %471 = vst.msk [vmem:[#allocation2 + $0xe] sm:$0x3] %vm144, %v457
    %s472 = scalar_lea.vmem [#allocation6], 32
    %v473 = vld [vmem:[%s472] sm:$0xff]
    %v474 = vld [vmem:[%s472 + $0x8] sm:$0xff]
    %v475 = vld [vmem:[%s472 + $0x10] sm:$0xff]
    %v476 = vld [vmem:[%s472 + $0x18] sm:$0xff]
    %v477 = vld [vmem:[#allocation2] sm:$0x3]
    %478 = vmatpush.msra.mxu0 0.0
    %479 = vmatpush.msra.mxu0 0.0
    %480 = vmatpush.msra.mxu0 0.0
    %481 = vmatpush.msra.mxu0 0.0
    %482 = vmatpush.msra.mxu0 0.0
    %483 = vmatpush.msra.mxu0 0.0
    %484 = vmatpush.msra.mxu0 0.0
    %485 = vmatpush.msra.mxu0 0.0
    %486 = vmatpush.msra.mxu0 0.0
    %487 = vmatpush.msra.mxu0 0.0
    %488 = vmatpush.msra.mxu0 0.0
    %489 = vmatpush.msra.mxu0 0.0
    %490 = vmatpush.msra.mxu0 %v476
    %491 = vmatpush.msra.mxu0 %v475
    %492 = vmatpush.msra.mxu0 %v474
    %493 = vmatpush.msra.mxu0 %v473
    %494 = vmatmul.f32.gmra.mxu0 %v160
    %v495 = vpop.f32.mrf.mxu0
    %v496 = vadd.f32 0.0, %v495
    %497 = vdwg.mxu0
    %v498 = vadd.f32 %v477, %v496
    %v499 = vtanh.pop %v498
    %500 = vst.msk [vmem:[#allocation2] sm:$0x3] %vm144, %v499
    %v501 = vld [vmem:[%s185] sm:$0x3]
    %v503 = vsel %vm158, %v499, 0
    %505 = vmatpush.msra.mxu0 0.0
    %506 = vmatpush.msra.mxu0 0.0
    %507 = vmatpush.msra.mxu0 0.0
    %508 = vmatpush.msra.mxu0 0.0
    %509 = vmatpush.msra.mxu0 0.0
    %510 = vmatpush.msra.mxu0 0.0
    %511 = vmatpush.msra.mxu0 0.0
    %512 = vmatpush.msra.mxu0 0.0
    %513 = vmatpush.msra.mxu0 0.0
    %514 = vmatpush.msra.mxu0 0.0
    %515 = vmatpush.msra.mxu0 0.0
    %516 = vmatpush.msra.mxu0 0.0
    %517 = vmatpush.msra.mxu0 %v476
    %518 = vmatpush.msra.mxu0 %v475
    %519 = vmatpush.msra.mxu0 %v474
    %520 = vmatpush.msra.mxu0 %v473
    %521 = vmatmul.f32.gmra.mxu0 %v503
    %v522 = vpop.f32.mrf.mxu0
    %v523 = vadd.f32 0.0, %v522
    %524 = vdwg.mxu0
    %v525 = vadd.f32 %v501, %v523
    %v526 = vtanh.pop %v525
    %527 = vst.msk [vmem:[%s185] sm:$0x3] %vm144, %v526
    %v528 = vld [vmem:[%s213] sm:$0x3]
    %v530 = vsel %vm158, %v526, 0
    %532 = vmatpush.msra.mxu0 0.0
    %533 = vmatpush.msra.mxu0 0.0
    %534 = vmatpush.msra.mxu0 0.0
    %535 = vmatpush.msra.mxu0 0.0
    %536 = vmatpush.msra.mxu0 0.0
    %537 = vmatpush.msra.mxu0 0.0
    %538 = vmatpush.msra.mxu0 0.0
    %539 = vmatpush.msra.mxu0 0.0
    %540 = vmatpush.msra.mxu0 0.0
    %541 = vmatpush.msra.mxu0 0.0
    %542 = vmatpush.msra.mxu0 0.0
    %543 = vmatpush.msra.mxu0 0.0
    %544 = vmatpush.msra.mxu0 %v476
    %545 = vmatpush.msra.mxu0 %v475
    %546 = vmatpush.msra.mxu0 %v474
    %547 = vmatpush.msra.mxu0 %v473
    %548 = vmatmul.f32.gmra.mxu0 %v530
    %v549 = vpop.f32.mrf.mxu0
    %v550 = vadd.f32 0.0, %v549
    %551 = vdwg.mxu0
    %v552 = vadd.f32 %v528, %v550
    %v553 = vtanh.pop %v552
    %554 = vst.msk [vmem:[%s213] sm:$0x3] %vm144, %v553
    %v555 = vld [vmem:[%s241] sm:$0x3]
    %v557 = vsel %vm158, %v553, 0
    %559 = vmatpush.msra.mxu0 0.0
    %560 = vmatpush.msra.mxu0 0.0
    %561 = vmatpush.msra.mxu0 0.0
    %562 = vmatpush.msra.mxu0 0.0
    %563 = vmatpush.msra.mxu0 0.0
    %564 = vmatpush.msra.mxu0 0.0
    %565 = vmatpush.msra.mxu0 0.0
    %566 = vmatpush.msra.mxu0 0.0
    %567 = vmatpush.msra.mxu0 0.0
    %568 = vmatpush.msra.mxu0 0.0
    %569 = vmatpush.msra.mxu0 0.0
    %570 = vmatpush.msra.mxu0 0.0
    %571 = vmatpush.msra.mxu0 %v476
    %572 = vmatpush.msra.mxu0 %v475
    %573 = vmatpush.msra.mxu0 %v474
    %574 = vmatpush.msra.mxu0 %v473
    %575 = vmatmul.f32.gmra.mxu0 %v557
    %v576 = vpop.f32.mrf.mxu0
    %v577 = vadd.f32 0.0, %v576
    %578 = vdwg.mxu0
    %v579 = vadd.f32 %v555, %v577
    %v580 = vtanh.pop %v579
    %581 = vst.msk [vmem:[%s241] sm:$0x3] %vm144, %v580
    %v582 = vld [vmem:[%s269] sm:$0x3]
    %v584 = vsel %vm158, %v580, 0
    %586 = vmatpush.msra.mxu0 0.0
    %587 = vmatpush.msra.mxu0 0.0
    %588 = vmatpush.msra.mxu0 0.0
    %589 = vmatpush.msra.mxu0 0.0
    %590 = vmatpush.msra.mxu0 0.0
    %591 = vmatpush.msra.mxu0 0.0
    %592 = vmatpush.msra.mxu0 0.0
    %593 = vmatpush.msra.mxu0 0.0
    %594 = vmatpush.msra.mxu0 0.0
    %595 = vmatpush.msra.mxu0 0.0
    %596 = vmatpush.msra.mxu0 0.0
    %597 = vmatpush.msra.mxu0 0.0
    %598 = vmatpush.msra.mxu0 %v476
    %599 = vmatpush.msra.mxu0 %v475
    %600 = vmatpush.msra.mxu0 %v474
    %601 = vmatpush.msra.mxu0 %v473
    %602 = vmatmul.f32.gmra.mxu0 %v584
    %v603 = vpop.f32.mrf.mxu0
    %v604 = vadd.f32 0.0, %v603
    %605 = vdwg.mxu0
    %v606 = vadd.f32 %v582, %v604
    %v607 = vtanh.pop %v606
    %608 = vst.msk [vmem:[%s269] sm:$0x3] %vm144, %v607
    %v609 = vld [vmem:[%s297] sm:$0x3]
    %v611 = vsel %vm158, %v607, 0
    %613 = vmatpush.msra.mxu0 0.0
    %614 = vmatpush.msra.mxu0 0.0
    %615 = vmatpush.msra.mxu0 0.0
    %616 = vmatpush.msra.mxu0 0.0
    %617 = vmatpush.msra.mxu0 0.0
    %618 = vmatpush.msra.mxu0 0.0
    %619 = vmatpush.msra.mxu0 0.0
    %620 = vmatpush.msra.mxu0 0.0
    %621 = vmatpush.msra.mxu0 0.0
    %622 = vmatpush.msra.mxu0 0.0
    %623 = vmatpush.msra.mxu0 0.0
    %624 = vmatpush.msra.mxu0 0.0
    %625 = vmatpush.msra.mxu0 %v476
    %626 = vmatpush.msra.mxu0 %v475
    %627 = vmatpush.msra.mxu0 %v474
    %628 = vmatpush.msra.mxu0 %v473
    %629 = vmatmul.f32.gmra.mxu0 %v611
    %v630 = vpop.f32.mrf.mxu0
    %v631 = vadd.f32 0.0, %v630
    %632 = vdwg.mxu0
    %v633 = vadd.f32 %v609, %v631
    %v634 = vtanh.pop %v633
    %635 = vst.msk [vmem:[%s297] sm:$0x3] %vm144, %v634
    %v636 = vld [vmem:[%s325] sm:$0x3]
    %v638 = vsel %vm158, %v634, 0
    %640 = vmatpush.msra.mxu0 0.0
    %641 = vmatpush.msra.mxu0 0.0
    %642 = vmatpush.msra.mxu0 0.0
    %643 = vmatpush.msra.mxu0 0.0
    %644 = vmatpush.msra.mxu0 0.0
    %645 = vmatpush.msra.mxu0 0.0
    %646 = vmatpush.msra.mxu0 0.0
    %647 = vmatpush.msra.mxu0 0.0
    %648 = vmatpush.msra.mxu0 0.0
    %649 = vmatpush.msra.mxu0 0.0
    %650 = vmatpush.msra.mxu0 0.0
    %651 = vmatpush.msra.mxu0 0.0
    %652 = vmatpush.msra.mxu0 %v476
    %653 = vmatpush.msra.mxu0 %v475
    %654 = vmatpush.msra.mxu0 %v474
    %655 = vmatpush.msra.mxu0 %v473
    %656 = vmatmul.f32.gmra.mxu0 %v638
    %v657 = vpop.f32.mrf.mxu0
    %v658 = vadd.f32 0.0, %v657
    %659 = vdwg.mxu0
    %v660 = vadd.f32 %v636, %v658
    %v661 = vtanh.pop %v660
    %662 = vst.msk [vmem:[%s325] sm:$0x3] %vm144, %v661
    %v663 = vld [vmem:[%s353] sm:$0x3]
    %v665 = vsel %vm158, %v661, 0
    %667 = vmatpush.msra.mxu0 0.0
    %668 = vmatpush.msra.mxu0 0.0
    %669 = vmatpush.msra.mxu0 0.0
    %670 = vmatpush.msra.mxu0 0.0
    %671 = vmatpush.msra.mxu0 0.0
    %672 = vmatpush.msra.mxu0 0.0
    %673 = vmatpush.msra.mxu0 0.0
    %674 = vmatpush.msra.mxu0 0.0
    %675 = vmatpush.msra.mxu0 0.0
    %676 = vmatpush.msra.mxu0 0.0
    %677 = vmatpush.msra.mxu0 0.0
    %678 = vmatpush.msra.mxu0 0.0
    %679 = vmatpush.msra.mxu0 %v476
    %680 = vmatpush.msra.mxu0 %v475
    %681 = vmatpush.msra.mxu0 %v474
    %682 = vmatpush.msra.mxu0 %v473
    %683 = vmatmul.f32.gmra.mxu0 %v665
    %v684 = vpop.f32.mrf.mxu0
    %v685 = vadd.f32 0.0, %v684
    %686 = vdwg.mxu0
    %v687 = vadd.f32 %v663, %v685
    %v688 = vtanh.pop %v687
    %689 = vst.msk [vmem:[%s353] sm:$0x3] %vm144, %v688
    %v690 = vld [vmem:[#allocation2] sm:$0x3]
    %v691 = vld [vmem:[#allocation2 + $0x2] sm:$0x3]
    %v692 = vld [vmem:[#allocation2 + $0x4] sm:$0x3]
    %v693 = vld [vmem:[#allocation2 + $0x6] sm:$0x3]
    %v694 = vld [vmem:[#allocation2 + $0x8] sm:$0x3]
    %v695 = vld [vmem:[#allocation2 + $0xa] sm:$0x3]
    %v696 = vld [vmem:[#allocation2 + $0xc] sm:$0x3]
    %v697 = vld [vmem:[#allocation2 + $0xe] sm:$0x3]
    %s698 = scalar_lea.vmem [#allocation4], 32
    %v699 = vld [vmem:[%s698] sm:$0xff]
    %v700 = vld [vmem:[%s698 + $0x8] sm:$0xff]
    %v701 = vld [vmem:[%s698 + $0x10] sm:$0xff]
    %v702 = vld [vmem:[%s698 + $0x18] sm:$0xff]
    %s703 = scalar_lea.vmem %s4, 2
    %v704 = vld [vmem:[%s703] sm:$0x1]
    %v706 = vperm.slane %v704, 0
    %716 = vst [vmem:[#allocation1] ss:$4 sm:$0xff] %v690
    %s717 = scalar_lea.vmem [#allocation1], 1
    %718 = vst [vmem:[%s717] ss:$4 sm:$0xff] %v691
    %s719 = scalar_lea.vmem [#allocation1], 2
    %720 = vst [vmem:[%s719] ss:$4 sm:$0xff] %v692
    %s721 = scalar_lea.vmem [#allocation1], 3
    %722 = vst [vmem:[%s721] ss:$4 sm:$0xff] %v693
    %s723 = scalar_lea.vmem [#allocation1], 32
    %724 = vst [vmem:[%s723] ss:$4 sm:$0xff] %v694
    %s725 = scalar_lea.vmem [#allocation1], 33
    %726 = vst [vmem:[%s725] ss:$4 sm:$0xff] %v695
    %s727 = scalar_lea.vmem [#allocation1], 34
    %728 = vst [vmem:[%s727] ss:$4 sm:$0xff] %v696
    %s729 = scalar_lea.vmem [#allocation1], 35
    %730 = vst [vmem:[%s729] ss:$4 sm:$0xff] %v697
    %v731 = vld.sshfl [vmem:[#allocation1] sm:$0xff pattern:$0x73625140]
    %v732 = vld.sshfl [vmem:[#allocation1 + $0x20] sm:$0xff pattern:$0x73625140]
    %v733 = vsel %vm158, %v731, 0
    %v735 = vsel %vm158, %v732, 0
    %737 = vmatpush.msra.mxu0 0.0
    %738 = vmatpush.msra.mxu0 0.0
    %739 = vmatpush.msra.mxu0 0.0
    %740 = vmatpush.msra.mxu0 0.0
    %741 = vmatpush.msra.mxu0 0.0
    %742 = vmatpush.msra.mxu0 0.0
    %743 = vmatpush.msra.mxu0 0.0
    %744 = vmatpush.msra.mxu0 0.0
    %745 = vmatpush.msra.mxu0 0.0
    %746 = vmatpush.msra.mxu0 0.0
    %747 = vmatpush.msra.mxu0 0.0
    %748 = vmatpush.msra.mxu0 0.0
    %749 = vmatpush.msra.mxu0 %v702
    %750 = vmatpush.msra.mxu0 %v701
    %751 = vmatpush.msra.mxu0 %v700
    %752 = vmatpush.msra.mxu0 %v699
    %753 = vmatmul.f32.gmra.mxu0 %v733
    %v754 = vpop.f32.mrf.mxu0
    %v755 = vadd.f32 %v706, %v754
    %756 = vmatmul.f32.gmra.mxu0 %v735
    %v757 = vpop.f32.mrf.mxu0
    %v758 = vadd.f32 %v706, %v757
    %759 = vdwg.mxu0
    %v762 = vrot.slane %v755, 2
    %v763 = vrot.slane %v755, 4
    %v764 = vrot.slane %v755, 6
    %v765 = vrot.slane %v758, 2
    %v766 = vrot.slane %v758, 4
    %v767 = vrot.slane %v758, 6
    %774 = vst.msk [vmem:[#allocation2] sm:$0x3] %vm144, %v755
    %775 = vst.msk [vmem:[#allocation2 + $0x2] sm:$0x3] %vm144, %v762
    %776 = vst.msk [vmem:[#allocation2 + $0x4] sm:$0x3] %vm144, %v763
    %777 = vst.msk [vmem:[#allocation2 + $0x6] sm:$0x3] %vm144, %v764
    %778 = vst.msk [vmem:[#allocation2 + $0x8] sm:$0x3] %vm144, %v758
    %779 = vst.msk [vmem:[#allocation2 + $0xa] sm:$0x3] %vm144, %v765
    %780 = vst.msk [vmem:[#allocation2 + $0xc] sm:$0x3] %vm144, %v766
    %781 = vst.msk [vmem:[#allocation2 + $0xe] sm:$0x3] %vm144, %v767
    %s782 = scalar_lea.vmem [#allocation6], 64
    %v783 = vld [vmem:[%s782] sm:$0xff]
    %v784 = vld [vmem:[%s782 + $0x8] sm:$0xff]
    %v785 = vld [vmem:[%s782 + $0x10] sm:$0xff]
    %v786 = vld [vmem:[%s782 + $0x18] sm:$0xff]
    %v787 = vld [vmem:[#allocation2] sm:$0x3]
    %788 = vmatpush.msra.mxu0 0.0
    %789 = vmatpush.msra.mxu0 0.0
    %790 = vmatpush.msra.mxu0 0.0
    %791 = vmatpush.msra.mxu0 0.0
    %792 = vmatpush.msra.mxu0 0.0
    %793 = vmatpush.msra.mxu0 0.0
    %794 = vmatpush.msra.mxu0 0.0
    %795 = vmatpush.msra.mxu0 0.0
    %796 = vmatpush.msra.mxu0 0.0
    %797 = vmatpush.msra.mxu0 0.0
    %798 = vmatpush.msra.mxu0 0.0
    %799 = vmatpush.msra.mxu0 0.0
    %800 = vmatpush.msra.mxu0 %v786
    %801 = vmatpush.msra.mxu0 %v785
    %802 = vmatpush.msra.mxu0 %v784
    %803 = vmatpush.msra.mxu0 %v783
    %804 = vmatmul.f32.gmra.mxu0 %v160
    %v805 = vpop.f32.mrf.mxu0
    %v806 = vadd.f32 0.0, %v805
    %807 = vdwg.mxu0
    %v808 = vadd.f32 %v787, %v806
    %v809 = vtanh.pop %v808
    %810 = vst.msk [vmem:[#allocation2] sm:$0x3] %vm144, %v809
    %v811 = vld [vmem:[%s185] sm:$0x3]
    %v813 = vsel %vm158, %v809, 0
    %815 = vmatpush.msra.mxu0 0.0
    %816 = vmatpush.msra.mxu0 0.0
    %817 = vmatpush.msra.mxu0 0.0
    %818 = vmatpush.msra.mxu0 0.0
    %819 = vmatpush.msra.mxu0 0.0
    %820 = vmatpush.msra.mxu0 0.0
    %821 = vmatpush.msra.mxu0 0.0
    %822 = vmatpush.msra.mxu0 0.0
    %823 = vmatpush.msra.mxu0 0.0
    %824 = vmatpush.msra.mxu0 0.0
    %825 = vmatpush.msra.mxu0 0.0
    %826 = vmatpush.msra.mxu0 0.0
    %827 = vmatpush.msra.mxu0 %v786
    %828 = vmatpush.msra.mxu0 %v785
    %829 = vmatpush.msra.mxu0 %v784
    %830 = vmatpush.msra.mxu0 %v783
    %831 = vmatmul.f32.gmra.mxu0 %v813
    %v832 = vpop.f32.mrf.mxu0
    %v833 = vadd.f32 0.0, %v832
    %834 = vdwg.mxu0
    %v835 = vadd.f32 %v811, %v833
    %v836 = vtanh.pop %v835
    %837 = vst.msk [vmem:[%s185] sm:$0x3] %vm144, %v836
    %v838 = vld [vmem:[%s213] sm:$0x3]
    %v840 = vsel %vm158, %v836, 0
    %842 = vmatpush.msra.mxu0 0.0
    %843 = vmatpush.msra.mxu0 0.0
    %844 = vmatpush.msra.mxu0 0.0
    %845 = vmatpush.msra.mxu0 0.0
    %846 = vmatpush.msra.mxu0 0.0
    %847 = vmatpush.msra.mxu0 0.0
    %848 = vmatpush.msra.mxu0 0.0
    %849 = vmatpush.msra.mxu0 0.0
    %850 = vmatpush.msra.mxu0 0.0
    %851 = vmatpush.msra.mxu0 0.0
    %852 = vmatpush.msra.mxu0 0.0
    %853 = vmatpush.msra.mxu0 0.0
    %854 = vmatpush.msra.mxu0 %v786
    %855 = vmatpush.msra.mxu0 %v785
    %856 = vmatpush.msra.mxu0 %v784
    %857 = vmatpush.msra.mxu0 %v783
    %858 = vmatmul.f32.gmra.mxu0 %v840
    %v859 = vpop.f32.mrf.mxu0
    %v860 = vadd.f32 0.0, %v859
    %861 = vdwg.mxu0
    %v862 = vadd.f32 %v838, %v860
    %v863 = vtanh.pop %v862
    %864 = vst.msk [vmem:[%s213] sm:$0x3] %vm144, %v863
    %v865 = vld [vmem:[%s241] sm:$0x3]
    %v867 = vsel %vm158, %v863, 0
    %869 = vmatpush.msra.mxu0 0.0
    %870 = vmatpush.msra.mxu0 0.0
    %871 = vmatpush.msra.mxu0 0.0
    %872 = vmatpush.msra.mxu0 0.0
    %873 = vmatpush.msra.mxu0 0.0
    %874 = vmatpush.msra.mxu0 0.0
    %875 = vmatpush.msra.mxu0 0.0
    %876 = vmatpush.msra.mxu0 0.0
    %877 = vmatpush.msra.mxu0 0.0
    %878 = vmatpush.msra.mxu0 0.0
    %879 = vmatpush.msra.mxu0 0.0
    %880 = vmatpush.msra.mxu0 0.0
    %881 = vmatpush.msra.mxu0 %v786
    %882 = vmatpush.msra.mxu0 %v785
    %883 = vmatpush.msra.mxu0 %v784
    %884 = vmatpush.msra.mxu0 %v783
    %885 = vmatmul.f32.gmra.mxu0 %v867
    %v886 = vpop.f32.mrf.mxu0
    %v887 = vadd.f32 0.0, %v886
    %888 = vdwg.mxu0
    %v889 = vadd.f32 %v865, %v887
    %v890 = vtanh.pop %v889
    %891 = vst.msk [vmem:[%s241] sm:$0x3] %vm144, %v890
    %v892 = vld [vmem:[%s269] sm:$0x3]
    %v894 = vsel %vm158, %v890, 0
    %896 = vmatpush.msra.mxu0 0.0
    %897 = vmatpush.msra.mxu0 0.0
    %898 = vmatpush.msra.mxu0 0.0
    %899 = vmatpush.msra.mxu0 0.0
    %900 = vmatpush.msra.mxu0 0.0
    %901 = vmatpush.msra.mxu0 0.0
    %902 = vmatpush.msra.mxu0 0.0
    %903 = vmatpush.msra.mxu0 0.0
    %904 = vmatpush.msra.mxu0 0.0
    %905 = vmatpush.msra.mxu0 0.0
    %906 = vmatpush.msra.mxu0 0.0
    %907 = vmatpush.msra.mxu0 0.0
    %908 = vmatpush.msra.mxu0 %v786
    %909 = vmatpush.msra.mxu0 %v785
    %910 = vmatpush.msra.mxu0 %v784
    %911 = vmatpush.msra.mxu0 %v783
    %912 = vmatmul.f32.gmra.mxu0 %v894
    %v913 = vpop.f32.mrf.mxu0
    %v914 = vadd.f32 0.0, %v913
    %915 = vdwg.mxu0
    %v916 = vadd.f32 %v892, %v914
    %v917 = vtanh.pop %v916
    %918 = vst.msk [vmem:[%s269] sm:$0x3] %vm144, %v917
    %v919 = vld [vmem:[%s297] sm:$0x3]
    %v921 = vsel %vm158, %v917, 0
    %923 = vmatpush.msra.mxu0 0.0
    %924 = vmatpush.msra.mxu0 0.0
    %925 = vmatpush.msra.mxu0 0.0
    %926 = vmatpush.msra.mxu0 0.0
    %927 = vmatpush.msra.mxu0 0.0
    %928 = vmatpush.msra.mxu0 0.0
    %929 = vmatpush.msra.mxu0 0.0
    %930 = vmatpush.msra.mxu0 0.0
    %931 = vmatpush.msra.mxu0 0.0
    %932 = vmatpush.msra.mxu0 0.0
    %933 = vmatpush.msra.mxu0 0.0
    %934 = vmatpush.msra.mxu0 0.0
    %935 = vmatpush.msra.mxu0 %v786
    %936 = vmatpush.msra.mxu0 %v785
    %937 = vmatpush.msra.mxu0 %v784
    %938 = vmatpush.msra.mxu0 %v783
    %939 = vmatmul.f32.gmra.mxu0 %v921
    %v940 = vpop.f32.mrf.mxu0
    %v941 = vadd.f32 0.0, %v940
    %942 = vdwg.mxu0
    %v943 = vadd.f32 %v919, %v941
    %v944 = vtanh.pop %v943
    %945 = vst.msk [vmem:[%s297] sm:$0x3] %vm144, %v944
    %v946 = vld [vmem:[%s325] sm:$0x3]
    %v948 = vsel %vm158, %v944, 0
    %950 = vmatpush.msra.mxu0 0.0
    %951 = vmatpush.msra.mxu0 0.0
    %952 = vmatpush.msra.mxu0 0.0
    %953 = vmatpush.msra.mxu0 0.0
    %954 = vmatpush.msra.mxu0 0.0
    %955 = vmatpush.msra.mxu0 0.0
    %956 = vmatpush.msra.mxu0 0.0
    %957 = vmatpush.msra.mxu0 0.0
    %958 = vmatpush.msra.mxu0 0.0
    %959 = vmatpush.msra.mxu0 0.0
    %960 = vmatpush.msra.mxu0 0.0
    %961 = vmatpush.msra.mxu0 0.0
    %962 = vmatpush.msra.mxu0 %v786
    %963 = vmatpush.msra.mxu0 %v785
    %964 = vmatpush.msra.mxu0 %v784
    %965 = vmatpush.msra.mxu0 %v783
    %966 = vmatmul.f32.gmra.mxu0 %v948
    %v967 = vpop.f32.mrf.mxu0
    %v968 = vadd.f32 0.0, %v967
    %969 = vdwg.mxu0
    %v970 = vadd.f32 %v946, %v968
    %v971 = vtanh.pop %v970
    %972 = vst.msk [vmem:[%s325] sm:$0x3] %vm144, %v971
    %v973 = vld [vmem:[%s353] sm:$0x3]
    %v975 = vsel %vm158, %v971, 0
    %977 = vmatpush.msra.mxu0 0.0
    %978 = vmatpush.msra.mxu0 0.0
    %979 = vmatpush.msra.mxu0 0.0
    %980 = vmatpush.msra.mxu0 0.0
    %981 = vmatpush.msra.mxu0 0.0
    %982 = vmatpush.msra.mxu0 0.0
    %983 = vmatpush.msra.mxu0 0.0
    %984 = vmatpush.msra.mxu0 0.0
    %985 = vmatpush.msra.mxu0 0.0
    %986 = vmatpush.msra.mxu0 0.0
    %987 = vmatpush.msra.mxu0 0.0
    %988 = vmatpush.msra.mxu0 0.0
    %989 = vmatpush.msra.mxu0 %v786
    %990 = vmatpush.msra.mxu0 %v785
    %991 = vmatpush.msra.mxu0 %v784
    %992 = vmatpush.msra.mxu0 %v783
    %993 = vmatmul.f32.gmra.mxu0 %v975
    %v994 = vpop.f32.mrf.mxu0
    %v995 = vadd.f32 0.0, %v994
    %996 = vdwg.mxu0
    %v997 = vadd.f32 %v973, %v995
    %v998 = vtanh.pop %v997
    %999 = vst.msk [vmem:[%s353] sm:$0x3] %vm144, %v998
    %v1000 = vld [vmem:[#allocation2] sm:$0x3]
    %v1001 = vld [vmem:[#allocation2 + $0x2] sm:$0x3]
    %v1002 = vld [vmem:[#allocation2 + $0x4] sm:$0x3]
    %v1003 = vld [vmem:[#allocation2 + $0x6] sm:$0x3]
    %v1004 = vld [vmem:[#allocation2 + $0x8] sm:$0x3]
    %v1005 = vld [vmem:[#allocation2 + $0xa] sm:$0x3]
    %v1006 = vld [vmem:[#allocation2 + $0xc] sm:$0x3]
    %v1007 = vld [vmem:[#allocation2 + $0xe] sm:$0x3]
    %s1008 = scalar_lea.vmem [#allocation4], 64
    %v1009 = vld [vmem:[%s1008] sm:$0xff]
    %v1010 = vld [vmem:[%s1008 + $0x8] sm:$0xff]
    %v1011 = vld [vmem:[%s1008 + $0x10] sm:$0xff]
    %v1012 = vld [vmem:[%s1008 + $0x18] sm:$0xff]
    %s1013 = scalar_lea.vmem %s4, 3
    %v1014 = vld [vmem:[%s1013] sm:$0x1]
    %v1016 = vperm.slane %v1014, 0
    %1026 = vst [vmem:[#allocation1] ss:$4 sm:$0xff] %v1000
    %s1027 = scalar_lea.vmem [#allocation1], 1
    %1028 = vst [vmem:[%s1027] ss:$4 sm:$0xff] %v1001
    %s1029 = scalar_lea.vmem [#allocation1], 2
    %1030 = vst [vmem:[%s1029] ss:$4 sm:$0xff] %v1002
    %s1031 = scalar_lea.vmem [#allocation1], 3
    %1032 = vst [vmem:[%s1031] ss:$4 sm:$0xff] %v1003
    %s1033 = scalar_lea.vmem [#allocation1], 32
    %1034 = vst [vmem:[%s1033] ss:$4 sm:$0xff] %v1004
    %s1035 = scalar_lea.vmem [#allocation1], 33
    %1036 = vst [vmem:[%s1035] ss:$4 sm:$0xff] %v1005
    %s1037 = scalar_lea.vmem [#allocation1], 34
    %1038 = vst [vmem:[%s1037] ss:$4 sm:$0xff] %v1006
    %s1039 = scalar_lea.vmem [#allocation1], 35
    %1040 = vst [vmem:[%s1039] ss:$4 sm:$0xff] %v1007
    %v1041 = vld.sshfl [vmem:[#allocation1] sm:$0xff pattern:$0x73625140]
    %v1042 = vld.sshfl [vmem:[#allocation1 + $0x20] sm:$0xff pattern:$0x73625140]
    %v1043 = vsel %vm158, %v1041, 0
    %v1045 = vsel %vm158, %v1042, 0
    %1047 = vmatpush.msra.mxu0 0.0
    %1048 = vmatpush.msra.mxu0 0.0
    %1049 = vmatpush.msra.mxu0 0.0
    %1050 = vmatpush.msra.mxu0 0.0
    %1051 = vmatpush.msra.mxu0 0.0
    %1052 = vmatpush.msra.mxu0 0.0
    %1053 = vmatpush.msra.mxu0 0.0
    %1054 = vmatpush.msra.mxu0 0.0
    %1055 = vmatpush.msra.mxu0 0.0
    %1056 = vmatpush.msra.mxu0 0.0
    %1057 = vmatpush.msra.mxu0 0.0
    %1058 = vmatpush.msra.mxu0 0.0
    %1059 = vmatpush.msra.mxu0 %v1012
    %1060 = vmatpush.msra.mxu0 %v1011
    %1061 = vmatpush.msra.mxu0 %v1010
    %1062 = vmatpush.msra.mxu0 %v1009
    %1063 = vmatmul.f32.gmra.mxu0 %v1043
    %v1064 = vpop.f32.mrf.mxu0
    %v1065 = vadd.f32 %v1016, %v1064
    %1066 = vmatmul.f32.gmra.mxu0 %v1045
    %v1067 = vpop.f32.mrf.mxu0
    %v1068 = vadd.f32 %v1016, %v1067
    %1069 = vdwg.mxu0
    %v1072 = vrot.slane %v1065, 2
    %v1073 = vrot.slane %v1065, 4
    %v1074 = vrot.slane %v1065, 6
    %v1075 = vrot.slane %v1068, 2
    %v1076 = vrot.slane %v1068, 4
    %v1077 = vrot.slane %v1068, 6
    %1084 = vst.msk [vmem:[#allocation2] sm:$0x3] %vm144, %v1065
    %1085 = vst.msk [vmem:[#allocation2 + $0x2] sm:$0x3] %vm144, %v1072
    %1086 = vst.msk [vmem:[#allocation2 + $0x4] sm:$0x3] %vm144, %v1073
    %1087 = vst.msk [vmem:[#allocation2 + $0x6] sm:$0x3] %vm144, %v1074
    %1088 = vst.msk [vmem:[#allocation2 + $0x8] sm:$0x3] %vm144, %v1068
    %1089 = vst.msk [vmem:[#allocation2 + $0xa] sm:$0x3] %vm144, %v1075
    %1090 = vst.msk [vmem:[#allocation2 + $0xc] sm:$0x3] %vm144, %v1076
    %1091 = vst.msk [vmem:[#allocation2 + $0xe] sm:$0x3] %vm144, %v1077
    %s1092 = scalar_lea.vmem [#allocation6], 96
    %v1093 = vld [vmem:[%s1092] sm:$0xff]
    %v1094 = vld [vmem:[%s1092 + $0x8] sm:$0xff]
    %v1095 = vld [vmem:[%s1092 + $0x10] sm:$0xff]
    %v1096 = vld [vmem:[%s1092 + $0x18] sm:$0xff]
    %v1097 = vld [vmem:[#allocation2] sm:$0x3]
    %1098 = vmatpush.msra.mxu0 0.0
    %1099 = vmatpush.msra.mxu0 0.0
    %1100 = vmatpush.msra.mxu0 0.0
    %1101 = vmatpush.msra.mxu0 0.0
    %1102 = vmatpush.msra.mxu0 0.0
    %1103 = vmatpush.msra.mxu0 0.0
    %1104 = vmatpush.msra.mxu0 0.0
    %1105 = vmatpush.msra.mxu0 0.0
    %1106 = vmatpush.msra.mxu0 0.0
    %1107 = vmatpush.msra.mxu0 0.0
    %1108 = vmatpush.msra.mxu0 0.0
    %1109 = vmatpush.msra.mxu0 0.0
    %1110 = vmatpush.msra.mxu0 %v1096
    %1111 = vmatpush.msra.mxu0 %v1095
    %1112 = vmatpush.msra.mxu0 %v1094
    %1113 = vmatpush.msra.mxu0 %v1093
    %1114 = vmatmul.f32.gmra.mxu0 %v160
    %v1115 = vpop.f32.mrf.mxu0
    %v1116 = vadd.f32 0.0, %v1115
    %1117 = vdwg.mxu0
    %v1118 = vadd.f32 %v1097, %v1116
    %v1119 = vtanh.pop %v1118
    %1120 = vst.msk [vmem:[#allocation2] sm:$0x3] %vm144, %v1119
    %v1121 = vld [vmem:[%s185] sm:$0x3]
    %v1123 = vsel %vm158, %v1119, 0
    %1125 = vmatpush.msra.mxu0 0.0
    %1126 = vmatpush.msra.mxu0 0.0
    %1127 = vmatpush.msra.mxu0 0.0
    %1128 = vmatpush.msra.mxu0 0.0
    %1129 = vmatpush.msra.mxu0 0.0
    %1130 = vmatpush.msra.mxu0 0.0
    %1131 = vmatpush.msra.mxu0 0.0
    %1132 = vmatpush.msra.mxu0 0.0
    %1133 = vmatpush.msra.mxu0 0.0
    %1134 = vmatpush.msra.mxu0 0.0
    %1135 = vmatpush.msra.mxu0 0.0
    %1136 = vmatpush.msra.mxu0 0.0
    %1137 = vmatpush.msra.mxu0 %v1096
    %1138 = vmatpush.msra.mxu0 %v1095
    %1139 = vmatpush.msra.mxu0 %v1094
    %1140 = vmatpush.msra.mxu0 %v1093
    %1141 = vmatmul.f32.gmra.mxu0 %v1123
    %v1142 = vpop.f32.mrf.mxu0
    %v1143 = vadd.f32 0.0, %v1142
    %1144 = vdwg.mxu0
    %v1145 = vadd.f32 %v1121, %v1143
    %v1146 = vtanh.pop %v1145
    %1147 = vst.msk [vmem:[%s185] sm:$0x3] %vm144, %v1146
    %v1148 = vld [vmem:[%s213] sm:$0x3]
    %v1150 = vsel %vm158, %v1146, 0
    %1152 = vmatpush.msra.mxu0 0.0
    %1153 = vmatpush.msra.mxu0 0.0
    %1154 = vmatpush.msra.mxu0 0.0
    %1155 = vmatpush.msra.mxu0 0.0
    %1156 = vmatpush.msra.mxu0 0.0
    %1157 = vmatpush.msra.mxu0 0.0
    %1158 = vmatpush.msra.mxu0 0.0
    %1159 = vmatpush.msra.mxu0 0.0
    %1160 = vmatpush.msra.mxu0 0.0
    %1161 = vmatpush.msra.mxu0 0.0
    %1162 = vmatpush.msra.mxu0 0.0
    %1163 = vmatpush.msra.mxu0 0.0
    %1164 = vmatpush.msra.mxu0 %v1096
    %1165 = vmatpush.msra.mxu0 %v1095
    %1166 = vmatpush.msra.mxu0 %v1094
    %1167 = vmatpush.msra.mxu0 %v1093
    %1168 = vmatmul.f32.gmra.mxu0 %v1150
    %v1169 = vpop.f32.mrf.mxu0
    %v1170 = vadd.f32 0.0, %v1169
    %1171 = vdwg.mxu0
    %v1172 = vadd.f32 %v1148, %v1170
    %v1173 = vtanh.pop %v1172
    %1174 = vst.msk [vmem:[%s213] sm:$0x3] %vm144, %v1173
    %v1175 = vld [vmem:[%s241] sm:$0x3]
    %v1177 = vsel %vm158, %v1173, 0
    %1179 = vmatpush.msra.mxu0 0.0
    %1180 = vmatpush.msra.mxu0 0.0
    %1181 = vmatpush.msra.mxu0 0.0
    %1182 = vmatpush.msra.mxu0 0.0
    %1183 = vmatpush.msra.mxu0 0.0
    %1184 = vmatpush.msra.mxu0 0.0
    %1185 = vmatpush.msra.mxu0 0.0
    %1186 = vmatpush.msra.mxu0 0.0
    %1187 = vmatpush.msra.mxu0 0.0
    %1188 = vmatpush.msra.mxu0 0.0
    %1189 = vmatpush.msra.mxu0 0.0
    %1190 = vmatpush.msra.mxu0 0.0
    %1191 = vmatpush.msra.mxu0 %v1096
    %1192 = vmatpush.msra.mxu0 %v1095
    %1193 = vmatpush.msra.mxu0 %v1094
    %1194 = vmatpush.msra.mxu0 %v1093
    %1195 = vmatmul.f32.gmra.mxu0 %v1177
    %v1196 = vpop.f32.mrf.mxu0
    %v1197 = vadd.f32 0.0, %v1196
    %1198 = vdwg.mxu0
    %v1199 = vadd.f32 %v1175, %v1197
    %v1200 = vtanh.pop %v1199
    %1201 = vst.msk [vmem:[%s241] sm:$0x3] %vm144, %v1200
    %v1202 = vld [vmem:[%s269] sm:$0x3]
    %v1204 = vsel %vm158, %v1200, 0
    %1206 = vmatpush.msra.mxu0 0.0
    %1207 = vmatpush.msra.mxu0 0.0
    %1208 = vmatpush.msra.mxu0 0.0
    %1209 = vmatpush.msra.mxu0 0.0
    %1210 = vmatpush.msra.mxu0 0.0
    %1211 = vmatpush.msra.mxu0 0.0
    %1212 = vmatpush.msra.mxu0 0.0
    %1213 = vmatpush.msra.mxu0 0.0
    %1214 = vmatpush.msra.mxu0 0.0
    %1215 = vmatpush.msra.mxu0 0.0
    %1216 = vmatpush.msra.mxu0 0.0
    %1217 = vmatpush.msra.mxu0 0.0
    %1218 = vmatpush.msra.mxu0 %v1096
    %1219 = vmatpush.msra.mxu0 %v1095
    %1220 = vmatpush.msra.mxu0 %v1094
    %1221 = vmatpush.msra.mxu0 %v1093
    %1222 = vmatmul.f32.gmra.mxu0 %v1204
    %v1223 = vpop.f32.mrf.mxu0
    %v1224 = vadd.f32 0.0, %v1223
    %1225 = vdwg.mxu0
    %v1226 = vadd.f32 %v1202, %v1224
    %v1227 = vtanh.pop %v1226
    %1228 = vst.msk [vmem:[%s269] sm:$0x3] %vm144, %v1227
    %v1229 = vld [vmem:[%s297] sm:$0x3]
    %v1231 = vsel %vm158, %v1227, 0
    %1233 = vmatpush.msra.mxu0 0.0
    %1234 = vmatpush.msra.mxu0 0.0
    %1235 = vmatpush.msra.mxu0 0.0
    %1236 = vmatpush.msra.mxu0 0.0
    %1237 = vmatpush.msra.mxu0 0.0
    %1238 = vmatpush.msra.mxu0 0.0
    %1239 = vmatpush.msra.mxu0 0.0
    %1240 = vmatpush.msra.mxu0 0.0
    %1241 = vmatpush.msra.mxu0 0.0
    %1242 = vmatpush.msra.mxu0 0.0
    %1243 = vmatpush.msra.mxu0 0.0
    %1244 = vmatpush.msra.mxu0 0.0
    %1245 = vmatpush.msra.mxu0 %v1096
    %1246 = vmatpush.msra.mxu0 %v1095
    %1247 = vmatpush.msra.mxu0 %v1094
    %1248 = vmatpush.msra.mxu0 %v1093
    %1249 = vmatmul.f32.gmra.mxu0 %v1231
    %v1250 = vpop.f32.mrf.mxu0
    %v1251 = vadd.f32 0.0, %v1250
    %1252 = vdwg.mxu0
    %v1253 = vadd.f32 %v1229, %v1251
    %v1254 = vtanh.pop %v1253
    %1255 = vst.msk [vmem:[%s297] sm:$0x3] %vm144, %v1254
    %v1256 = vld [vmem:[%s325] sm:$0x3]
    %v1258 = vsel %vm158, %v1254, 0
    %1260 = vmatpush.msra.mxu0 0.0
    %1261 = vmatpush.msra.mxu0 0.0
    %1262 = vmatpush.msra.mxu0 0.0
    %1263 = vmatpush.msra.mxu0 0.0
    %1264 = vmatpush.msra.mxu0 0.0
    %1265 = vmatpush.msra.mxu0 0.0
    %1266 = vmatpush.msra.mxu0 0.0
    %1267 = vmatpush.msra.mxu0 0.0
    %1268 = vmatpush.msra.mxu0 0.0
    %1269 = vmatpush.msra.mxu0 0.0
    %1270 = vmatpush.msra.mxu0 0.0
    %1271 = vmatpush.msra.mxu0 0.0
    %1272 = vmatpush.msra.mxu0 %v1096
    %1273 = vmatpush.msra.mxu0 %v1095
    %1274 = vmatpush.msra.mxu0 %v1094
    %1275 = vmatpush.msra.mxu0 %v1093
    %1276 = vmatmul.f32.gmra.mxu0 %v1258
    %v1277 = vpop.f32.mrf.mxu0
    %v1278 = vadd.f32 0.0, %v1277
    %1279 = vdwg.mxu0
    %v1280 = vadd.f32 %v1256, %v1278
    %v1281 = vtanh.pop %v1280
    %1282 = vst.msk [vmem:[%s325] sm:$0x3] %vm144, %v1281
    %v1283 = vld [vmem:[%s353] sm:$0x3]
    %v1285 = vsel %vm158, %v1281, 0
    %1287 = vmatpush.msra.mxu0 0.0
    %1288 = vmatpush.msra.mxu0 0.0
    %1289 = vmatpush.msra.mxu0 0.0
    %1290 = vmatpush.msra.mxu0 0.0
    %1291 = vmatpush.msra.mxu0 0.0
    %1292 = vmatpush.msra.mxu0 0.0
    %1293 = vmatpush.msra.mxu0 0.0
    %1294 = vmatpush.msra.mxu0 0.0
    %1295 = vmatpush.msra.mxu0 0.0
    %1296 = vmatpush.msra.mxu0 0.0
    %1297 = vmatpush.msra.mxu0 0.0
    %1298 = vmatpush.msra.mxu0 0.0
    %1299 = vmatpush.msra.mxu0 %v1096
    %1300 = vmatpush.msra.mxu0 %v1095
    %1301 = vmatpush.msra.mxu0 %v1094
    %1302 = vmatpush.msra.mxu0 %v1093
    %1303 = vmatmul.f32.gmra.mxu0 %v1285
    %v1304 = vpop.f32.mrf.mxu0
    %v1305 = vadd.f32 0.0, %v1304
    %1306 = vdwg.mxu0
    %v1307 = vadd.f32 %v1283, %v1305
    %v1308 = vtanh.pop %v1307
    %1309 = vst.msk [vmem:[%s353] sm:$0x3] %vm144, %v1308
    %v1310 = vld [vmem:[#allocation2] sm:$0x3]
    %v1311 = vld [vmem:[#allocation2 + $0x2] sm:$0x3]
    %v1312 = vld [vmem:[#allocation2 + $0x4] sm:$0x3]
    %v1313 = vld [vmem:[#allocation2 + $0x6] sm:$0x3]
    %v1314 = vld [vmem:[#allocation2 + $0x8] sm:$0x3]
    %v1315 = vld [vmem:[#allocation2 + $0xa] sm:$0x3]
    %v1316 = vld [vmem:[#allocation2 + $0xc] sm:$0x3]
    %v1317 = vld [vmem:[#allocation2 + $0xe] sm:$0x3]
    %s1318 = scalar_lea.vmem [#allocation4], 96
    %v1319 = vld [vmem:[%s1318] sm:$0xff]
    %v1320 = vld [vmem:[%s1318 + $0x8] sm:$0xff]
    %v1321 = vld [vmem:[%s1318 + $0x10] sm:$0xff]
    %v1322 = vld [vmem:[%s1318 + $0x18] sm:$0xff]
    %s1323 = scalar_lea.vmem %s4, 4
    %v1324 = vld [vmem:[%s1323] sm:$0x1]
    %v1326 = vperm.slane %v1324, 0
    %1336 = vst [vmem:[#allocation1] ss:$4 sm:$0xff] %v1310
    %s1337 = scalar_lea.vmem [#allocation1], 1
    %1338 = vst [vmem:[%s1337] ss:$4 sm:$0xff] %v1311
    %s1339 = scalar_lea.vmem [#allocation1], 2
    %1340 = vst [vmem:[%s1339] ss:$4 sm:$0xff] %v1312
    %s1341 = scalar_lea.vmem [#allocation1], 3
    %1342 = vst [vmem:[%s1341] ss:$4 sm:$0xff] %v1313
    %s1343 = scalar_lea.vmem [#allocation1], 32
    %1344 = vst [vmem:[%s1343] ss:$4 sm:$0xff] %v1314
    %s1345 = scalar_lea.vmem [#allocation1], 33
    %1346 = vst [vmem:[%s1345] ss:$4 sm:$0xff] %v1315
    %s1347 = scalar_lea.vmem [#allocation1], 34
    %1348 = vst [vmem:[%s1347] ss:$4 sm:$0xff] %v1316
    %s1349 = scalar_lea.vmem [#allocation1], 35
    %1350 = vst [vmem:[%s1349] ss:$4 sm:$0xff] %v1317
    %v1351 = vld.sshfl [vmem:[#allocation1] sm:$0xff pattern:$0x73625140]
    %v1352 = vld.sshfl [vmem:[#allocation1 + $0x20] sm:$0xff pattern:$0x73625140]
    %v1353 = vsel %vm158, %v1351, 0
    %v1355 = vsel %vm158, %v1352, 0
    %1357 = vmatpush.msra.mxu0 0.0
    %1358 = vmatpush.msra.mxu0 0.0
    %1359 = vmatpush.msra.mxu0 0.0
    %1360 = vmatpush.msra.mxu0 0.0
    %1361 = vmatpush.msra.mxu0 0.0
    %1362 = vmatpush.msra.mxu0 0.0
    %1363 = vmatpush.msra.mxu0 0.0
    %1364 = vmatpush.msra.mxu0 0.0
    %1365 = vmatpush.msra.mxu0 0.0
    %1366 = vmatpush.msra.mxu0 0.0
    %1367 = vmatpush.msra.mxu0 0.0
    %1368 = vmatpush.msra.mxu0 0.0
    %1369 = vmatpush.msra.mxu0 %v1322
    %1370 = vmatpush.msra.mxu0 %v1321
    %1371 = vmatpush.msra.mxu0 %v1320
    %1372 = vmatpush.msra.mxu0 %v1319
    %1373 = vmatmul.f32.gmra.mxu0 %v1353
    %v1374 = vpop.f32.mrf.mxu0
    %v1375 = vadd.f32 %v1326, %v1374
    %1376 = vmatmul.f32.gmra.mxu0 %v1355
    %v1377 = vpop.f32.mrf.mxu0
    %v1378 = vadd.f32 %v1326, %v1377
    %1379 = vdwg.mxu0
    %v1382 = vrot.slane %v1375, 2
    %v1383 = vrot.slane %v1375, 4
    %v1384 = vrot.slane %v1375, 6
    %v1385 = vrot.slane %v1378, 2
    %v1386 = vrot.slane %v1378, 4
    %v1387 = vrot.slane %v1378, 6
    %1394 = vst.msk [vmem:[#allocation2] sm:$0x3] %vm144, %v1375
    %1395 = vst.msk [vmem:[#allocation2 + $0x2] sm:$0x3] %vm144, %v1382
    %1396 = vst.msk [vmem:[#allocation2 + $0x4] sm:$0x3] %vm144, %v1383
    %1397 = vst.msk [vmem:[#allocation2 + $0x6] sm:$0x3] %vm144, %v1384
    %1398 = vst.msk [vmem:[#allocation2 + $0x8] sm:$0x3] %vm144, %v1378
    %1399 = vst.msk [vmem:[#allocation2 + $0xa] sm:$0x3] %vm144, %v1385
    %1400 = vst.msk [vmem:[#allocation2 + $0xc] sm:$0x3] %vm144, %v1386
    %1401 = vst.msk [vmem:[#allocation2 + $0xe] sm:$0x3] %vm144, %v1387
    %s1402 = scalar_lea.vmem [#allocation6], 128
    %v1403 = vld [vmem:[%s1402] sm:$0xff]
    %v1404 = vld [vmem:[%s1402 + $0x8] sm:$0xff]
    %v1405 = vld [vmem:[%s1402 + $0x10] sm:$0xff]
    %v1406 = vld [vmem:[%s1402 + $0x18] sm:$0xff]
    %v1407 = vld [vmem:[#allocation2] sm:$0x3]
    %1408 = vmatpush.msra.mxu0 0.0
    %1409 = vmatpush.msra.mxu0 0.0
    %1410 = vmatpush.msra.mxu0 0.0
    %1411 = vmatpush.msra.mxu0 0.0
    %1412 = vmatpush.msra.mxu0 0.0
    %1413 = vmatpush.msra.mxu0 0.0
    %1414 = vmatpush.msra.mxu0 0.0
    %1415 = vmatpush.msra.mxu0 0.0
    %1416 = vmatpush.msra.mxu0 0.0
    %1417 = vmatpush.msra.mxu0 0.0
    %1418 = vmatpush.msra.mxu0 0.0
    %1419 = vmatpush.msra.mxu0 0.0
    %1420 = vmatpush.msra.mxu0 %v1406
    %1421 = vmatpush.msra.mxu0 %v1405
    %1422 = vmatpush.msra.mxu0 %v1404
    %1423 = vmatpush.msra.mxu0 %v1403
    %1424 = vmatmul.f32.gmra.mxu0 %v160
    %v1425 = vpop.f32.mrf.mxu0
    %v1426 = vadd.f32 0.0, %v1425
    %1427 = vdwg.mxu0
    %v1428 = vadd.f32 %v1407, %v1426
    %v1429 = vtanh.pop %v1428
    %1430 = vst.msk [vmem:[#allocation2] sm:$0x3] %vm144, %v1429
    %v1431 = vld [vmem:[%s185] sm:$0x3]
    %v1433 = vsel %vm158, %v1429, 0
    %1435 = vmatpush.msra.mxu0 0.0
    %1436 = vmatpush.msra.mxu0 0.0
    %1437 = vmatpush.msra.mxu0 0.0
    %1438 = vmatpush.msra.mxu0 0.0
    %1439 = vmatpush.msra.mxu0 0.0
    %1440 = vmatpush.msra.mxu0 0.0
    %1441 = vmatpush.msra.mxu0 0.0
    %1442 = vmatpush.msra.mxu0 0.0
    %1443 = vmatpush.msra.mxu0 0.0
    %1444 = vmatpush.msra.mxu0 0.0
    %1445 = vmatpush.msra.mxu0 0.0
    %1446 = vmatpush.msra.mxu0 0.0
    %1447 = vmatpush.msra.mxu0 %v1406
    %1448 = vmatpush.msra.mxu0 %v1405
    %1449 = vmatpush.msra.mxu0 %v1404
    %1450 = vmatpush.msra.mxu0 %v1403
    %1451 = vmatmul.f32.gmra.mxu0 %v1433
    %v1452 = vpop.f32.mrf.mxu0
    %v1453 = vadd.f32 0.0, %v1452
    %1454 = vdwg.mxu0
    %v1455 = vadd.f32 %v1431, %v1453
    %v1456 = vtanh.pop %v1455
    %1457 = vst.msk [vmem:[%s185] sm:$0x3] %vm144, %v1456
    %v1458 = vld [vmem:[%s213] sm:$0x3]
    %v1460 = vsel %vm158, %v1456, 0
    %1462 = vmatpush.msra.mxu0 0.0
    %1463 = vmatpush.msra.mxu0 0.0
    %1464 = vmatpush.msra.mxu0 0.0
    %1465 = vmatpush.msra.mxu0 0.0
    %1466 = vmatpush.msra.mxu0 0.0
    %1467 = vmatpush.msra.mxu0 0.0
    %1468 = vmatpush.msra.mxu0 0.0
    %1469 = vmatpush.msra.mxu0 0.0
    %1470 = vmatpush.msra.mxu0 0.0
    %1471 = vmatpush.msra.mxu0 0.0
    %1472 = vmatpush.msra.mxu0 0.0
    %1473 = vmatpush.msra.mxu0 0.0
    %1474 = vmatpush.msra.mxu0 %v1406
    %1475 = vmatpush.msra.mxu0 %v1405
    %1476 = vmatpush.msra.mxu0 %v1404
    %1477 = vmatpush.msra.mxu0 %v1403
    %1478 = vmatmul.f32.gmra.mxu0 %v1460
    %v1479 = vpop.f32.mrf.mxu0
    %v1480 = vadd.f32 0.0, %v1479
    %1481 = vdwg.mxu0
    %v1482 = vadd.f32 %v1458, %v1480
    %v1483 = vtanh.pop %v1482
    %1484 = vst.msk [vmem:[%s213] sm:$0x3] %vm144, %v1483
    %v1485 = vld [vmem:[%s241] sm:$0x3]
    %v1487 = vsel %vm158, %v1483, 0
    %1489 = vmatpush.msra.mxu0 0.0
    %1490 = vmatpush.msra.mxu0 0.0
    %1491 = vmatpush.msra.mxu0 0.0
    %1492 = vmatpush.msra.mxu0 0.0
    %1493 = vmatpush.msra.mxu0 0.0
    %1494 = vmatpush.msra.mxu0 0.0
    %1495 = vmatpush.msra.mxu0 0.0
    %1496 = vmatpush.msra.mxu0 0.0
    %1497 = vmatpush.msra.mxu0 0.0
    %1498 = vmatpush.msra.mxu0 0.0
    %1499 = vmatpush.msra.mxu0 0.0
    %1500 = vmatpush.msra.mxu0 0.0
    %1501 = vmatpush.msra.mxu0 %v1406
    %1502 = vmatpush.msra.mxu0 %v1405
    %1503 = vmatpush.msra.mxu0 %v1404
    %1504 = vmatpush.msra.mxu0 %v1403
    %1505 = vmatmul.f32.gmra.mxu0 %v1487
    %v1506 = vpop.f32.mrf.mxu0
    %v1507 = vadd.f32 0.0, %v1506
    %1508 = vdwg.mxu0
    %v1509 = vadd.f32 %v1485, %v1507
    %v1510 = vtanh.pop %v1509
    %1511 = vst.msk [vmem:[%s241] sm:$0x3] %vm144, %v1510
    %v1512 = vld [vmem:[%s269] sm:$0x3]
    %v1514 = vsel %vm158, %v1510, 0
    %1516 = vmatpush.msra.mxu0 0.0
    %1517 = vmatpush.msra.mxu0 0.0
    %1518 = vmatpush.msra.mxu0 0.0
    %1519 = vmatpush.msra.mxu0 0.0
    %1520 = vmatpush.msra.mxu0 0.0
    %1521 = vmatpush.msra.mxu0 0.0
    %1522 = vmatpush.msra.mxu0 0.0
    %1523 = vmatpush.msra.mxu0 0.0
    %1524 = vmatpush.msra.mxu0 0.0
    %1525 = vmatpush.msra.mxu0 0.0
    %1526 = vmatpush.msra.mxu0 0.0
    %1527 = vmatpush.msra.mxu0 0.0
    %1528 = vmatpush.msra.mxu0 %v1406
    %1529 = vmatpush.msra.mxu0 %v1405
    %1530 = vmatpush.msra.mxu0 %v1404
    %1531 = vmatpush.msra.mxu0 %v1403
    %1532 = vmatmul.f32.gmra.mxu0 %v1514
    %v1533 = vpop.f32.mrf.mxu0
    %v1534 = vadd.f32 0.0, %v1533
    %1535 = vdwg.mxu0
    %v1536 = vadd.f32 %v1512, %v1534
    %v1537 = vtanh.pop %v1536
    %1538 = vst.msk [vmem:[%s269] sm:$0x3] %vm144, %v1537
    %v1539 = vld [vmem:[%s297] sm:$0x3]
    %v1541 = vsel %vm158, %v1537, 0
    %1543 = vmatpush.msra.mxu0 0.0
    %1544 = vmatpush.msra.mxu0 0.0
    %1545 = vmatpush.msra.mxu0 0.0
    %1546 = vmatpush.msra.mxu0 0.0
    %1547 = vmatpush.msra.mxu0 0.0
    %1548 = vmatpush.msra.mxu0 0.0
    %1549 = vmatpush.msra.mxu0 0.0
    %1550 = vmatpush.msra.mxu0 0.0
    %1551 = vmatpush.msra.mxu0 0.0
    %1552 = vmatpush.msra.mxu0 0.0
    %1553 = vmatpush.msra.mxu0 0.0
    %1554 = vmatpush.msra.mxu0 0.0
    %1555 = vmatpush.msra.mxu0 %v1406
    %1556 = vmatpush.msra.mxu0 %v1405
    %1557 = vmatpush.msra.mxu0 %v1404
    %1558 = vmatpush.msra.mxu0 %v1403
    %1559 = vmatmul.f32.gmra.mxu0 %v1541
    %v1560 = vpop.f32.mrf.mxu0
    %v1561 = vadd.f32 0.0, %v1560
    %1562 = vdwg.mxu0
    %v1563 = vadd.f32 %v1539, %v1561
    %v1564 = vtanh.pop %v1563
    %1565 = vst.msk [vmem:[%s297] sm:$0x3] %vm144, %v1564
    %v1566 = vld [vmem:[%s325] sm:$0x3]
    %v1568 = vsel %vm158, %v1564, 0
    %1570 = vmatpush.msra.mxu0 0.0
    %1571 = vmatpush.msra.mxu0 0.0
    %1572 = vmatpush.msra.mxu0 0.0
    %1573 = vmatpush.msra.mxu0 0.0
    %1574 = vmatpush.msra.mxu0 0.0
    %1575 = vmatpush.msra.mxu0 0.0
    %1576 = vmatpush.msra.mxu0 0.0
    %1577 = vmatpush.msra.mxu0 0.0
    %1578 = vmatpush.msra.mxu0 0.0
    %1579 = vmatpush.msra.mxu0 0.0
    %1580 = vmatpush.msra.mxu0 0.0
    %1581 = vmatpush.msra.mxu0 0.0
    %1582 = vmatpush.msra.mxu0 %v1406
    %1583 = vmatpush.msra.mxu0 %v1405
    %1584 = vmatpush.msra.mxu0 %v1404
    %1585 = vmatpush.msra.mxu0 %v1403
    %1586 = vmatmul.f32.gmra.mxu0 %v1568
    %v1587 = vpop.f32.mrf.mxu0
    %v1588 = vadd.f32 0.0, %v1587
    %1589 = vdwg.mxu0
    %v1590 = vadd.f32 %v1566, %v1588
    %v1591 = vtanh.pop %v1590
    %1592 = vst.msk [vmem:[%s325] sm:$0x3] %vm144, %v1591
    %v1593 = vld [vmem:[%s353] sm:$0x3]
    %v1595 = vsel %vm158, %v1591, 0
    %1597 = vmatpush.msra.mxu0 0.0
    %1598 = vmatpush.msra.mxu0 0.0
    %1599 = vmatpush.msra.mxu0 0.0
    %1600 = vmatpush.msra.mxu0 0.0
    %1601 = vmatpush.msra.mxu0 0.0
    %1602 = vmatpush.msra.mxu0 0.0
    %1603 = vmatpush.msra.mxu0 0.0
    %1604 = vmatpush.msra.mxu0 0.0
    %1605 = vmatpush.msra.mxu0 0.0
    %1606 = vmatpush.msra.mxu0 0.0
    %1607 = vmatpush.msra.mxu0 0.0
    %1608 = vmatpush.msra.mxu0 0.0
    %1609 = vmatpush.msra.mxu0 %v1406
    %1610 = vmatpush.msra.mxu0 %v1405
    %1611 = vmatpush.msra.mxu0 %v1404
    %1612 = vmatpush.msra.mxu0 %v1403
    %1613 = vmatmul.f32.gmra.mxu0 %v1595
    %v1614 = vpop.f32.mrf.mxu0
    %v1615 = vadd.f32 0.0, %v1614
    %1616 = vdwg.mxu0
    %v1617 = vadd.f32 %v1593, %v1615
    %v1618 = vtanh.pop %v1617
    %1619 = vst.msk [vmem:[%s353] sm:$0x3] %vm144, %v1618
    %v1620 = vld [vmem:[#allocation2] sm:$0x3]
    %v1621 = vld [vmem:[#allocation2 + $0x2] sm:$0x3]
    %v1622 = vld [vmem:[#allocation2 + $0x4] sm:$0x3]
    %v1623 = vld [vmem:[#allocation2 + $0x6] sm:$0x3]
    %v1624 = vld [vmem:[#allocation2 + $0x8] sm:$0x3]
    %v1625 = vld [vmem:[#allocation2 + $0xa] sm:$0x3]
    %v1626 = vld [vmem:[#allocation2 + $0xc] sm:$0x3]
    %v1627 = vld [vmem:[#allocation2 + $0xe] sm:$0x3]
    %v1628 = vld [vmem:[%s5] sm:$0xff]
    %v1629 = vld [vmem:[%s5 + $0x8] sm:$0xff]
    %v1630 = vld [vmem:[%s5 + $0x10] sm:$0xff]
    %v1631 = vld [vmem:[%s5 + $0x18] sm:$0xff]
    %v1632 = vld [vmem:[#allocation3] sm:$0x1]
    %v1634 = vperm.slane %v1632, 0
    %1644 = vst [vmem:[#allocation1] ss:$4 sm:$0xff] %v1620
    %s1645 = scalar_lea.vmem [#allocation1], 1
    %1646 = vst [vmem:[%s1645] ss:$4 sm:$0xff] %v1621
    %s1647 = scalar_lea.vmem [#allocation1], 2
    %1648 = vst [vmem:[%s1647] ss:$4 sm:$0xff] %v1622
    %s1649 = scalar_lea.vmem [#allocation1], 3
    %1650 = vst [vmem:[%s1649] ss:$4 sm:$0xff] %v1623
    %s1651 = scalar_lea.vmem [#allocation1], 32
    %1652 = vst [vmem:[%s1651] ss:$4 sm:$0xff] %v1624
    %s1653 = scalar_lea.vmem [#allocation1], 33
    %1654 = vst [vmem:[%s1653] ss:$4 sm:$0xff] %v1625
    %s1655 = scalar_lea.vmem [#allocation1], 34
    %1656 = vst [vmem:[%s1655] ss:$4 sm:$0xff] %v1626
    %s1657 = scalar_lea.vmem [#allocation1], 35
    %1658 = vst [vmem:[%s1657] ss:$4 sm:$0xff] %v1627
    %v1659 = vld.sshfl [vmem:[#allocation1] sm:$0xff pattern:$0x73625140]
    %v1660 = vld.sshfl [vmem:[#allocation1 + $0x20] sm:$0xff pattern:$0x73625140]
    %v1661 = vsel %vm158, %v1659, 0
    %v1663 = vsel %vm158, %v1660, 0
    %1665 = vmatpush.msra.mxu0 0.0
    %1666 = vmatpush.msra.mxu0 0.0
    %1667 = vmatpush.msra.mxu0 0.0
    %1668 = vmatpush.msra.mxu0 0.0
    %1669 = vmatpush.msra.mxu0 0.0
    %1670 = vmatpush.msra.mxu0 0.0
    %1671 = vmatpush.msra.mxu0 0.0
    %1672 = vmatpush.msra.mxu0 0.0
    %1673 = vmatpush.msra.mxu0 0.0
    %1674 = vmatpush.msra.mxu0 0.0
    %1675 = vmatpush.msra.mxu0 0.0
    %1676 = vmatpush.msra.mxu0 0.0
    %1677 = vmatpush.msra.mxu0 %v1631
    %1678 = vmatpush.msra.mxu0 %v1630
    %1679 = vmatpush.msra.mxu0 %v1629
    %1680 = vmatpush.msra.mxu0 %v1628
    %1681 = vmatmul.f32.gmra.mxu0 %v1661
    %v1682 = vpop.f32.mrf.mxu0
    %v1683 = vadd.f32 %v1634, %v1682
    %1684 = vmatmul.f32.gmra.mxu0 %v1663
    %v1685 = vpop.f32.mrf.mxu0
    %v1686 = vadd.f32 %v1634, %v1685
    %1687 = vdwg.mxu0
    %v1690 = vrot.slane %v1683, 2
    %v1691 = vrot.slane %v1683, 4
    %v1692 = vrot.slane %v1683, 6
    %v1693 = vrot.slane %v1686, 2
    %v1694 = vrot.slane %v1686, 4
    %v1695 = vrot.slane %v1686, 6
    %vm1702 = vcmask 1024
    %1703 = vst.msk [vmem:[%s7] sm:$0x3] %vm1702, %v1683
    %1704 = vst.msk [vmem:[%s7 + $0x2] sm:$0x3] %vm1702, %v1690
    %1705 = vst.msk [vmem:[%s7 + $0x4] sm:$0x3] %vm1702, %v1691
    %1706 = vst.msk [vmem:[%s7 + $0x6] sm:$0x3] %vm1702, %v1692
    %1707 = vst.msk [vmem:[%s7 + $0x8] sm:$0x3] %vm1702, %v1686
    %1708 = vst.msk [vmem:[%s7 + $0xa] sm:$0x3] %vm1702, %v1693
    %1709 = vst.msk [vmem:[%s7 + $0xc] sm:$0x3] %vm1702, %v1694
    %1710 = vst.msk [vmem:[%s7 + $0xe] sm:$0x3] %vm1702, %v1695
    // Predicated region
    $region38: #{tpu_custom_call.1} parent=1 // pred_check
      _
    $region39: #{tpu_custom_call.1} parent=1 // pred_check_branch
      %1712 = sbr.rel (0) target = $region41
    $region40: #{tpu_custom_call.1} parent=1 // pred_region
      _
    $region41: #{tpu_custom_call.1} parent=1 // pred_fallthru
      _
    // Predicated region
    $region42: #{tpu_custom_call.1} parent=1 // pred_check
      _
    $region43: #{tpu_custom_call.1} parent=1 // pred_check_branch
      %1714 = sbr.rel (0) target = $region45
    $region44: #{tpu_custom_call.1} parent=1 // pred_region
      _
    $region45: #{tpu_custom_call.1} parent=1 // pred_fallthru
      _
    %1715 = vsyncpa [#allocation5], 1
    %1716 = vsyncpa [#allocation7], 1

</llo_original>
